<compile_context>
chip_gen: v6e
topology: v6e:2x2x1
jax: 0.10.0
libtpu: 0.0.40
codegen_flags: <defaults>
</compile_context>

<pallas_src>
import functools

import jax
import jax.numpy as jnp
import numpy as np
from jax.experimental import pallas as pl
from jax.experimental.pallas import tpu as pltpu


# ------------------------------- fused kernel ------------------------------- #

def _fused_kernel(x_ref, w1_ref, b1_ref, w2_ref, b2_ref,
                  wr1_ref, br1_ref, wr2_ref, br2_ref,
                  wf1_ref, bf1_ref, wf2_ref, bf2_ref,
                  o_ref, *, k, d, l1, l2):
    f32 = jnp.float32
    x = x_ref[0]                                                     # (L, Cin)

    # --- conv1: Conv1d(Cin, 32, k=7, dilation=3), one im2col matmul (K*Cin=28).
    xcol = jnp.concatenate([x[i * d: i * d + l1, :] for i in range(k)], axis=1)
    h1 = jnp.dot(xcol, w1_ref[...], preferred_element_type=f32) + b1_ref[...]
    h1 = jnp.maximum(h1, 0.0)                                        # (l1, 32)

    # --- conv2: Conv1d(32, 64, k=7, dilation=3), contraction K*32 = 224.
    hcol = jnp.concatenate([h1[i * d: i * d + l2, :] for i in range(k)], axis=1)
    h2 = jnp.dot(hcol, w2_ref[...], preferred_element_type=f32) + b2_ref[...]
    h2 = jnp.maximum(h2, 0.0)                                        # (l2, 64)

    # --- Residual block (assumed structure, see TODO): in-kernel zero halo,
    #     two k=3/pad=1 convs (contraction 192), skip add before the final ReLU.
    zrow = jnp.zeros((1, h2.shape[1]), f32)
    hp = jnp.concatenate([zrow, h2, zrow], axis=0)                   # (l2+2, 64)
    rcol = jnp.concatenate([hp[i:i + l2, :] for i in range(3)], axis=1)
    r = jnp.dot(rcol, wr1_ref[...], preferred_element_type=f32) + br1_ref[...]
    r = jnp.maximum(r, 0.0)
    rp = jnp.concatenate([zrow, r, zrow], axis=0)
    rcol2 = jnp.concatenate([rp[i:i + l2, :] for i in range(3)], axis=1)
    r = jnp.dot(rcol2, wr2_ref[...], preferred_element_type=f32) + br2_ref[...] + h2
    r = jnp.maximum(r, 0.0)                                          # (l2, 64)

    # --- Flatten (length-major) via lane-concat; wf1 rows were permuted once in
    #     pack_params so this matches PyTorch's channel-major features.view(B,-1).
    feats = jnp.concatenate([r[l:l + 1, :] for l in range(l2)], axis=1)  # (1, l2*64)

    # --- MLP: Linear(F,100) + ReLU + Linear(100,1).
    h = jnp.dot(feats, wf1_ref[...], preferred_element_type=f32) + bf1_ref[...]
    h = jnp.maximum(h, 0.0)
    out = jnp.dot(h, wf2_ref[...], preferred_element_type=f32) + bf2_ref[...]  # (1,1)
    o_ref[...] = out[None].astype(o_ref.dtype)                       # (1,1,1)


# ------------------------------- model forward ------------------------------ #

def eeg_age_net(packed, x_ncl, *, k=7, d=3):
    """x_ncl: (B, C_in, L) float32 (same axis convention as nn.Conv1d input)."""
    B, cin, L = x_ncl.shape
    l1 = L - d * (k - 1)
    l2 = l1 - d * (k - 1)
    x = jnp.transpose(x_ncl, (0, 2, 1))                              # (B, L, Cin), tiny

    full2d = lambda a: pl.BlockSpec(a.shape, lambda i: (0, 0))

    kern = functools.partial(_fused_kernel, k=k, d=d, l1=l1, l2=l2)
    out = pl.pallas_call(
        kern,
        out_shape=jax.ShapeDtypeStruct((B, 1, 1), jnp.float32),
        grid=(B,),
        in_specs=[
            pl.BlockSpec((1, L, cin), lambda i: (i, 0, 0)),
            full2d(packed["w1"]), full2d(packed["b1"]),
            full2d(packed["w2"]), full2d(packed["b2"]),
            full2d(packed["wr1"]), full2d(packed["br1"]),
            full2d(packed["wr2"]), full2d(packed["br2"]),
            full2d(packed["wf1"]), full2d(packed["bf1"]),
            full2d(packed["wf2"]), full2d(packed["bf2"]),
        ],
        out_specs=pl.BlockSpec((1, 1, 1), lambda i: (i, 0, 0)),
        compiler_params=pltpu.CompilerParams(dimension_semantics=("parallel",)),
    )(x, packed["w1"], packed["b1"], packed["w2"], packed["b2"],
      packed["wr1"], packed["br1"], packed["wr2"], packed["br2"],
      packed["wf1"], packed["bf1"], packed["wf2"], packed["bf2"])
    return jnp.squeeze(out)                                          # (B,)


# --------------------- parameter init / one-time packing -------------------- #

def init_params(key, c_in, length):
    """Torch-layout params: conv w (K, Cin, Cout); FC1 rows indexed c*L2 + l."""
    def conv_init(kk_key, kk, cin, cout):
        bound = 1.0 / np.sqrt(cin * kk)
        kw, kb = jax.random.split(kk_key)
        w = jax.random.uniform(kw, (kk, cin, cout), jnp.float32, -bound, bound)
        b = jax.random.uniform(kb, (1, cout), jnp.float32, -bound, bound)
        return w, b

    def lin_init(kk_key, fin, fout):
        bound = 1.0 / np.sqrt(fin)
        kw, kb = jax.random.split(kk_key)
        w = jax.random.uniform(kw, (fin, fout), jnp.float32, -bound, bound)
        b = jax.random.uniform(kb, (1, fout), jnp.float32, -bound, bound)
        return w, b

    l1 = length - 3 * 6          # Conv1d(k=7, dilation=3, pad=0)
    l2 = l1 - 3 * 6
    keys = jax.random.split(key, 6)
    p = {}
    p["w1"], p["b1"] = conv_init(keys[0], 7, c_in, 32)
    p["w2"], p["b2"] = conv_init(keys[1], 7, 32, 64)
    p["wr1"], p["br1"] = conv_init(keys[2], 3, 64, 64)
    p["wr2"], p["br2"] = conv_init(keys[3], 3, 64, 64)
    p["wf1"], p["bf1"] = lin_init(keys[4], 64 * l2, 100)
    p["wf2"], p["bf2"] = lin_init(keys[5], 100, 1)
    return p


def pack_params(p, l2):
    """One-time host-side reshapes/permutation into kernel-friendly layouts."""
    q = {}
    # im2col weight slabs: (K, Cin, Cout) -> (K*Cin, Cout), row index = k*Cin + c.
    q["w1"] = p["w1"].reshape(-1, p["w1"].shape[-1])
    q["w2"] = p["w2"].reshape(-1, p["w2"].shape[-1])
    q["wr1"] = p["wr1"].reshape(-1, p["wr1"].shape[-1])
    q["wr2"] = p["wr2"].reshape(-1, p["wr2"].shape[-1])
    # FC1: permute rows from torch's channel-major flatten index (c*l2 + l) to the
    # kernel's length-major flatten index (l*C + c) -> no runtime transpose.
    C = p["wr2"].shape[-1]
    H = p["wf1"].shape[-1]
    q["wf1"] = p["wf1"].reshape(C, l2, H).transpose(1, 0, 2).reshape(l2 * C, H)
    for name in ("b1", "b2", "br1", "br2", "bf1", "bf2", "wf2"):
        q[name] = p[name]
    return q


# ------------------------------ pure-JAX reference --------------------------- #

def _conv_ref(x_ncl, w_kco, b, dilation):
    w_oik = jnp.transpose(w_kco, (2, 1, 0))          # (Cout, Cin, K) like PyTorch
    y = jax.lax.conv_general_dilated(
        x_ncl, w_oik, window_strides=(1,), padding=[(0, 0)],
        rhs_dilation=(dilation,), dimension_numbers=("NCH", "OIH", "NCH"),
        precision=jax.lax.Precision.HIGHEST)
    return y + b[0][None, :, None]


def reference_forward(params, x):
    h = jax.nn.relu(_conv_ref(x, params["w1"], params["b1"], 3))
    h = jax.nn.relu(_conv_ref(h, params["w2"], params["b2"], 3))
    r = jax.nn.relu(_conv_ref(jnp.pad(h, ((0, 0), (0, 0), (1, 1))),
                              params["wr1"], params["br1"], 1))
    r = jax.nn.relu(_conv_ref(jnp.pad(r, ((0, 0), (0, 0), (1, 1))),
                              params["wr2"], params["br2"], 1) + h)
    feats = r.reshape(r.shape[0], -1)                # channel-major flatten (B, C*L)
    h = jax.nn.relu(feats @ params["wf1"] + params["bf1"])
    out = h @ params["wf2"] + params["bf2"]
    return jnp.squeeze(out)


# ------------------------------------ main ----------------------------------- #

if __name__ == "__main__":
    B, C_IN, LENGTH = 2, 4, 64                        # input_shape = (B, C_in, L); L > 36
    L2 = LENGTH - 3 * 6 - 3 * 6                       # 28

    key = jax.random.PRNGKey(0)
    kp, kx = jax.random.split(key)
    params = init_params(kp, C_IN, LENGTH)
    packed = pack_params(params, L2)
    x = jax.random.normal(kx, (B, C_IN, LENGTH), jnp.float32)

    fwd = jax.jit(eeg_age_net)
    out = jax.block_until_ready(fwd(packed, x))

    ref = reference_forward(params, x)
    np.testing.assert_allclose(np.asarray(out), np.asarray(ref), rtol=2e-3, atol=2e-3)
    print("KERNEL_OK")
</pallas_src>

<mosaic_0001>
module attributes {stable_mosaic.version = 11 : i64} {
  func.func @_fused_kernel(%arg0: i32, %arg1: memref<1x64x4xf32, #tpu.memory_space<vmem>>, %arg2: memref<28x32xf32, #tpu.memory_space<vmem>>, %arg3: memref<1x32xf32, #tpu.memory_space<vmem>>, %arg4: memref<224x64xf32, #tpu.memory_space<vmem>>, %arg5: memref<1x64xf32, #tpu.memory_space<vmem>>, %arg6: memref<192x64xf32, #tpu.memory_space<vmem>>, %arg7: memref<1x64xf32, #tpu.memory_space<vmem>>, %arg8: memref<192x64xf32, #tpu.memory_space<vmem>>, %arg9: memref<1x64xf32, #tpu.memory_space<vmem>>, %arg10: memref<1792x100xf32, #tpu.memory_space<vmem>>, %arg11: memref<1x100xf32, #tpu.memory_space<vmem>>, %arg12: memref<100x1xf32, #tpu.memory_space<vmem>>, %arg13: memref<1x1xf32, #tpu.memory_space<vmem>>, %arg14: memref<1x1x1xf32, #tpu.memory_space<vmem>>) attributes {dimension_semantics = [#tpu.dimension_semantics<parallel>], iteration_bounds = array<i64: 2>, scalar_prefetch = 0 : i64, scratch_operands = 0 : i64, tpu.core_type = #tpu.core_type<tc>, window_params = [{transform_indices = @transform_0, window_bounds = array<i64: 1, 64, 4>}, {pipeline_mode = #tpu.pipeline_mode<synchronous>, transform_indices = @transform_1, window_bounds = array<i64: 28, 32>}, {pipeline_mode = #tpu.pipeline_mode<synchronous>, transform_indices = @transform_2, window_bounds = array<i64: 1, 32>}, {pipeline_mode = #tpu.pipeline_mode<synchronous>, transform_indices = @transform_3, window_bounds = array<i64: 224, 64>}, {pipeline_mode = #tpu.pipeline_mode<synchronous>, transform_indices = @transform_4, window_bounds = array<i64: 1, 64>}, {pipeline_mode = #tpu.pipeline_mode<synchronous>, transform_indices = @transform_5, window_bounds = array<i64: 192, 64>}, {pipeline_mode = #tpu.pipeline_mode<synchronous>, transform_indices = @transform_6, window_bounds = array<i64: 1, 64>}, {pipeline_mode = #tpu.pipeline_mode<synchronous>, transform_indices = @transform_7, window_bounds = array<i64: 192, 64>}, {pipeline_mode = #tpu.pipeline_mode<synchronous>, transform_indices = @transform_8, window_bounds = array<i64: 1, 64>}, {pipeline_mode = #tpu.pipeline_mode<synchronous>, transform_indices = @transform_9, window_bounds = array<i64: 1792, 100>}, {pipeline_mode = #tpu.pipeline_mode<synchronous>, transform_indices = @transform_10, window_bounds = array<i64: 1, 100>}, {pipeline_mode = #tpu.pipeline_mode<synchronous>, transform_indices = @transform_11, window_bounds = array<i64: 100, 1>}, {pipeline_mode = #tpu.pipeline_mode<synchronous>, transform_indices = @transform_12, window_bounds = array<i64: 1, 1>}, {transform_indices = @transform_13, window_bounds = array<i64: 1, 1, 1>}]} {
    %c0 = arith.constant 0 : index
    %c0_0 = arith.constant 0 : index
    %c0_1 = arith.constant 0 : index
    %0 = vector.load %arg1[%c0, %c0_0, %c0_1] : memref<1x64x4xf32, #tpu.memory_space<vmem>>, vector<1x64x4xf32>
    %1 = vector.shape_cast %0 : vector<1x64x4xf32> to vector<64x4xf32>
    %2 = vector.extract_strided_slice %1 {offsets = [0, 0], sizes = [46, 4], strides = [1, 1]} : vector<64x4xf32> to vector<46x4xf32>
    %3 = vector.extract_strided_slice %1 {offsets = [3, 0], sizes = [46, 4], strides = [1, 1]} : vector<64x4xf32> to vector<46x4xf32>
    %4 = vector.extract_strided_slice %1 {offsets = [6, 0], sizes = [46, 4], strides = [1, 1]} : vector<64x4xf32> to vector<46x4xf32>
    %5 = vector.extract_strided_slice %1 {offsets = [9, 0], sizes = [46, 4], strides = [1, 1]} : vector<64x4xf32> to vector<46x4xf32>
    %6 = vector.extract_strided_slice %1 {offsets = [12, 0], sizes = [46, 4], strides = [1, 1]} : vector<64x4xf32> to vector<46x4xf32>
    %7 = vector.extract_strided_slice %1 {offsets = [15, 0], sizes = [46, 4], strides = [1, 1]} : vector<64x4xf32> to vector<46x4xf32>
    %8 = vector.extract_strided_slice %1 {offsets = [18, 0], sizes = [46, 4], strides = [1, 1]} : vector<64x4xf32> to vector<46x4xf32>
    %9 = tpu.concatenate %2, %3, %4, %5, %6, %7, %8 in 1 : vector<46x4xf32>, vector<46x4xf32>, vector<46x4xf32>, vector<46x4xf32>, vector<46x4xf32>, vector<46x4xf32>, vector<46x4xf32> -> vector<46x28xf32>
    %c0_2 = arith.constant 0 : index
    %c0_3 = arith.constant 0 : index
    %10 = vector.load %arg2[%c0_2, %c0_3] : memref<28x32xf32, #tpu.memory_space<vmem>>, vector<28x32xf32>
    %cst = arith.constant dense<0.000000e+00> : vector<46x32xf32>
    %11 = tpu.matmul %9, %10, %cst {dimension_numbers = #tpu.dot_dimension_numbers<[1], [0], [0], [1], [0, 0, 1, 1], [], []>} : vector<46x28xf32>, vector<28x32xf32>, vector<46x32xf32> -> vector<46x32xf32>
    %c0_4 = arith.constant 0 : index
    %c0_5 = arith.constant 0 : index
    %12 = vector.load %arg3[%c0_4, %c0_5] : memref<1x32xf32, #tpu.memory_space<vmem>>, vector<1x32xf32>
    %13 = vector.broadcast %12 : vector<1x32xf32> to vector<46x32xf32>
    %14 = arith.addf %11, %13 : vector<46x32xf32>
    %cst_6 = arith.constant 0.000000e+00 : f32
    %15 = vector.broadcast %cst_6 : f32 to vector<46x32xf32>
    %16 = arith.maximumf %14, %15 : vector<46x32xf32>
    %17 = vector.extract_strided_slice %16 {offsets = [0, 0], sizes = [28, 32], strides = [1, 1]} : vector<46x32xf32> to vector<28x32xf32>
    %18 = vector.extract_strided_slice %16 {offsets = [3, 0], sizes = [28, 32], strides = [1, 1]} : vector<46x32xf32> to vector<28x32xf32>
    %19 = vector.extract_strided_slice %16 {offsets = [6, 0], sizes = [28, 32], strides = [1, 1]} : vector<46x32xf32> to vector<28x32xf32>
    %20 = vector.extract_strided_slice %16 {offsets = [9, 0], sizes = [28, 32], strides = [1, 1]} : vector<46x32xf32> to vector<28x32xf32>
    %21 = vector.extract_strided_slice %16 {offsets = [12, 0], sizes = [28, 32], strides = [1, 1]} : vector<46x32xf32> to vector<28x32xf32>
    %22 = vector.extract_strided_slice %16 {offsets = [15, 0], sizes = [28, 32], strides = [1, 1]} : vector<46x32xf32> to vector<28x32xf32>
    %23 = vector.extract_strided_slice %16 {offsets = [18, 0], sizes = [28, 32], strides = [1, 1]} : vector<46x32xf32> to vector<28x32xf32>
    %24 = tpu.concatenate %17, %18, %19, %20, %21, %22, %23 in 1 : vector<28x32xf32>, vector<28x32xf32>, vector<28x32xf32>, vector<28x32xf32>, vector<28x32xf32>, vector<28x32xf32>, vector<28x32xf32> -> vector<28x224xf32>
    %c0_7 = arith.constant 0 : index
    %c0_8 = arith.constant 0 : index
    %25 = vector.load %arg4[%c0_7, %c0_8] : memref<224x64xf32, #tpu.memory_space<vmem>>, vector<224x64xf32>
    %cst_9 = arith.constant dense<0.000000e+00> : vector<28x64xf32>
    %26 = tpu.matmul %24, %25, %cst_9 {dimension_numbers = #tpu.dot_dimension_numbers<[1], [0], [0], [1], [0, 0, 1, 1], [], []>} : vector<28x224xf32>, vector<224x64xf32>, vector<28x64xf32> -> vector<28x64xf32>
    %c0_10 = arith.constant 0 : index
    %c0_11 = arith.constant 0 : index
    %27 = vector.load %arg5[%c0_10, %c0_11] : memref<1x64xf32, #tpu.memory_space<vmem>>, vector<1x64xf32>
    %28 = vector.broadcast %27 : vector<1x64xf32> to vector<28x64xf32>
    %29 = arith.addf %26, %28 : vector<28x64xf32>
    %cst_12 = arith.constant 0.000000e+00 : f32
    %30 = vector.broadcast %cst_12 : f32 to vector<28x64xf32>
    %31 = arith.maximumf %29, %30 : vector<28x64xf32>
    %cst_13 = arith.constant 0.000000e+00 : f32
    %32 = vector.broadcast %cst_13 : f32 to vector<1x64xf32>
    %33 = tpu.concatenate %32, %31, %32 in 0 : vector<1x64xf32>, vector<28x64xf32>, vector<1x64xf32> -> vector<30x64xf32>
    %34 = vector.extract_strided_slice %33 {offsets = [0, 0], sizes = [28, 64], strides = [1, 1]} : vector<30x64xf32> to vector<28x64xf32>
    %35 = vector.extract_strided_slice %33 {offsets = [1, 0], sizes = [28, 64], strides = [1, 1]} : vector<30x64xf32> to vector<28x64xf32>
    %36 = vector.extract_strided_slice %33 {offsets = [2, 0], sizes = [28, 64], strides = [1, 1]} : vector<30x64xf32> to vector<28x64xf32>
    %37 = tpu.concatenate %34, %35, %36 in 1 : vector<28x64xf32>, vector<28x64xf32>, vector<28x64xf32> -> vector<28x192xf32>
    %c0_14 = arith.constant 0 : index
    %c0_15 = arith.constant 0 : index
    %38 = vector.load %arg6[%c0_14, %c0_15] : memref<192x64xf32, #tpu.memory_space<vmem>>, vector<192x64xf32>
    %cst_16 = arith.constant dense<0.000000e+00> : vector<28x64xf32>
    %39 = tpu.matmul %37, %38, %cst_16 {dimension_numbers = #tpu.dot_dimension_numbers<[1], [0], [0], [1], [0, 0, 1, 1], [], []>} : vector<28x192xf32>, vector<192x64xf32>, vector<28x64xf32> -> vector<28x64xf32>
    %c0_17 = arith.constant 0 : index
    %c0_18 = arith.constant 0 : index
    %40 = vector.load %arg7[%c0_17, %c0_18] : memref<1x64xf32, #tpu.memory_space<vmem>>, vector<1x64xf32>
    %41 = vector.broadcast %40 : vector<1x64xf32> to vector<28x64xf32>
    %42 = arith.addf %39, %41 : vector<28x64xf32>
    %cst_19 = arith.constant 0.000000e+00 : f32
    %43 = vector.broadcast %cst_19 : f32 to vector<28x64xf32>
    %44 = arith.maximumf %42, %43 : vector<28x64xf32>
    %45 = tpu.concatenate %32, %44, %32 in 0 : vector<1x64xf32>, vector<28x64xf32>, vector<1x64xf32> -> vector<30x64xf32>
    %46 = vector.extract_strided_slice %45 {offsets = [0, 0], sizes = [28, 64], strides = [1, 1]} : vector<30x64xf32> to vector<28x64xf32>
    %47 = vector.extract_strided_slice %45 {offsets = [1, 0], sizes = [28, 64], strides = [1, 1]} : vector<30x64xf32> to vector<28x64xf32>
    %48 = vector.extract_strided_slice %45 {offsets = [2, 0], sizes = [28, 64], strides = [1, 1]} : vector<30x64xf32> to vector<28x64xf32>
    %49 = tpu.concatenate %46, %47, %48 in 1 : vector<28x64xf32>, vector<28x64xf32>, vector<28x64xf32> -> vector<28x192xf32>
    %c0_20 = arith.constant 0 : index
    %c0_21 = arith.constant 0 : index
    %50 = vector.load %arg8[%c0_20, %c0_21] : memref<192x64xf32, #tpu.memory_space<vmem>>, vector<192x64xf32>
    %cst_22 = arith.constant dense<0.000000e+00> : vector<28x64xf32>
    %51 = tpu.matmul %49, %50, %cst_22 {dimension_numbers = #tpu.dot_dimension_numbers<[1], [0], [0], [1], [0, 0, 1, 1], [], []>} : vector<28x192xf32>, vector<192x64xf32>, vector<28x64xf32> -> vector<28x64xf32>
    %c0_23 = arith.constant 0 : index
    %c0_24 = arith.constant 0 : index
    %52 = vector.load %arg9[%c0_23, %c0_24] : memref<1x64xf32, #tpu.memory_space<vmem>>, vector<1x64xf32>
    %53 = vector.broadcast %52 : vector<1x64xf32> to vector<28x64xf32>
    %54 = arith.addf %51, %53 : vector<28x64xf32>
    %55 = arith.addf %54, %31 : vector<28x64xf32>
    %cst_25 = arith.constant 0.000000e+00 : f32
    %56 = vector.broadcast %cst_25 : f32 to vector<28x64xf32>
    %57 = arith.maximumf %55, %56 : vector<28x64xf32>
    %58 = vector.extract_strided_slice %57 {offsets = [0, 0], sizes = [1, 64], strides = [1, 1]} : vector<28x64xf32> to vector<1x64xf32>
    %59 = vector.extract_strided_slice %57 {offsets = [1, 0], sizes = [1, 64], strides = [1, 1]} : vector<28x64xf32> to vector<1x64xf32>
    %60 = vector.extract_strided_slice %57 {offsets = [2, 0], sizes = [1, 64], strides = [1, 1]} : vector<28x64xf32> to vector<1x64xf32>
    %61 = vector.extract_strided_slice %57 {offsets = [3, 0], sizes = [1, 64], strides = [1, 1]} : vector<28x64xf32> to vector<1x64xf32>
    %62 = vector.extract_strided_slice %57 {offsets = [4, 0], sizes = [1, 64], strides = [1, 1]} : vector<28x64xf32> to vector<1x64xf32>
    %63 = vector.extract_strided_slice %57 {offsets = [5, 0], sizes = [1, 64], strides = [1, 1]} : vector<28x64xf32> to vector<1x64xf32>
    %64 = vector.extract_strided_slice %57 {offsets = [6, 0], sizes = [1, 64], strides = [1, 1]} : vector<28x64xf32> to vector<1x64xf32>
    %65 = vector.extract_strided_slice %57 {offsets = [7, 0], sizes = [1, 64], strides = [1, 1]} : vector<28x64xf32> to vector<1x64xf32>
    %66 = vector.extract_strided_slice %57 {offsets = [8, 0], sizes = [1, 64], strides = [1, 1]} : vector<28x64xf32> to vector<1x64xf32>
    %67 = vector.extract_strided_slice %57 {offsets = [9, 0], sizes = [1, 64], strides = [1, 1]} : vector<28x64xf32> to vector<1x64xf32>
    %68 = vector.extract_strided_slice %57 {offsets = [10, 0], sizes = [1, 64], strides = [1, 1]} : vector<28x64xf32> to vector<1x64xf32>
    %69 = vector.extract_strided_slice %57 {offsets = [11, 0], sizes = [1, 64], strides = [1, 1]} : vector<28x64xf32> to vector<1x64xf32>
    %70 = vector.extract_strided_slice %57 {offsets = [12, 0], sizes = [1, 64], strides = [1, 1]} : vector<28x64xf32> to vector<1x64xf32>
    %71 = vector.extract_strided_slice %57 {offsets = [13, 0], sizes = [1, 64], strides = [1, 1]} : vector<28x64xf32> to vector<1x64xf32>
    %72 = vector.extract_strided_slice %57 {offsets = [14, 0], sizes = [1, 64], strides = [1, 1]} : vector<28x64xf32> to vector<1x64xf32>
    %73 = vector.extract_strided_slice %57 {offsets = [15, 0], sizes = [1, 64], strides = [1, 1]} : vector<28x64xf32> to vector<1x64xf32>
    %74 = vector.extract_strided_slice %57 {offsets = [16, 0], sizes = [1, 64], strides = [1, 1]} : vector<28x64xf32> to vector<1x64xf32>
    %75 = vector.extract_strided_slice %57 {offsets = [17, 0], sizes = [1, 64], strides = [1, 1]} : vector<28x64xf32> to vector<1x64xf32>
    %76 = vector.extract_strided_slice %57 {offsets = [18, 0], sizes = [1, 64], strides = [1, 1]} : vector<28x64xf32> to vector<1x64xf32>
    %77 = vector.extract_strided_slice %57 {offsets = [19, 0], sizes = [1, 64], strides = [1, 1]} : vector<28x64xf32> to vector<1x64xf32>
    %78 = vector.extract_strided_slice %57 {offsets = [20, 0], sizes = [1, 64], strides = [1, 1]} : vector<28x64xf32> to vector<1x64xf32>
    %79 = vector.extract_strided_slice %57 {offsets = [21, 0], sizes = [1, 64], strides = [1, 1]} : vector<28x64xf32> to vector<1x64xf32>
    %80 = vector.extract_strided_slice %57 {offsets = [22, 0], sizes = [1, 64], strides = [1, 1]} : vector<28x64xf32> to vector<1x64xf32>
    %81 = vector.extract_strided_slice %57 {offsets = [23, 0], sizes = [1, 64], strides = [1, 1]} : vector<28x64xf32> to vector<1x64xf32>
    %82 = vector.extract_strided_slice %57 {offsets = [24, 0], sizes = [1, 64], strides = [1, 1]} : vector<28x64xf32> to vector<1x64xf32>
    %83 = vector.extract_strided_slice %57 {offsets = [25, 0], sizes = [1, 64], strides = [1, 1]} : vector<28x64xf32> to vector<1x64xf32>
    %84 = vector.extract_strided_slice %57 {offsets = [26, 0], sizes = [1, 64], strides = [1, 1]} : vector<28x64xf32> to vector<1x64xf32>
    %85 = vector.extract_strided_slice %57 {offsets = [27, 0], sizes = [1, 64], strides = [1, 1]} : vector<28x64xf32> to vector<1x64xf32>
    %86 = tpu.concatenate %58, %59, %60, %61, %62, %63, %64, %65, %66, %67, %68, %69, %70, %71, %72, %73 in 1 : vector<1x64xf32>, vector<1x64xf32>, vector<1x64xf32>, vector<1x64xf32>, vector<1x64xf32>, vector<1x64xf32>, vector<1x64xf32>, vector<1x64xf32>, vector<1x64xf32>, vector<1x64xf32>, vector<1x64xf32>, vector<1x64xf32>, vector<1x64xf32>, vector<1x64xf32>, vector<1x64xf32>, vector<1x64xf32> -> vector<1x1024xf32>
    %87 = tpu.concatenate %74, %75, %76, %77, %78, %79, %80, %81, %82, %83, %84, %85 in 1 : vector<1x64xf32>, vector<1x64xf32>, vector<1x64xf32>, vector<1x64xf32>, vector<1x64xf32>, vector<1x64xf32>, vector<1x64xf32>, vector<1x64xf32>, vector<1x64xf32>, vector<1x64xf32>, vector<1x64xf32>, vector<1x64xf32> -> vector<1x768xf32>
    %88 = tpu.concatenate %86, %87 in 1 : vector<1x1024xf32>, vector<1x768xf32> -> vector<1x1792xf32>
    %c0_26 = arith.constant 0 : index
    %c0_27 = arith.constant 0 : index
    %89 = vector.load %arg10[%c0_26, %c0_27] : memref<1792x100xf32, #tpu.memory_space<vmem>>, vector<1792x100xf32>
    %cst_28 = arith.constant dense<0.000000e+00> : vector<1x100xf32>
    %90 = tpu.matmul %88, %89, %cst_28 {dimension_numbers = #tpu.dot_dimension_numbers<[1], [0], [0], [1], [0, 0, 1, 1], [], []>} : vector<1x1792xf32>, vector<1792x100xf32>, vector<1x100xf32> -> vector<1x100xf32>
    %c0_29 = arith.constant 0 : index
    %c0_30 = arith.constant 0 : index
    %91 = vector.load %arg11[%c0_29, %c0_30] : memref<1x100xf32, #tpu.memory_space<vmem>>, vector<1x100xf32>
    %92 = arith.addf %90, %91 : vector<1x100xf32>
    %cst_31 = arith.constant 0.000000e+00 : f32
    %93 = vector.broadcast %cst_31 : f32 to vector<1x100xf32>
    %94 = arith.maximumf %92, %93 : vector<1x100xf32>
    %c0_32 = arith.constant 0 : index
    %c0_33 = arith.constant 0 : index
    %95 = vector.load %arg12[%c0_32, %c0_33] : memref<100x1xf32, #tpu.memory_space<vmem>>, vector<100x1xf32>
    %cst_34 = arith.constant dense<0.000000e+00> : vector<1x1xf32>
    %96 = tpu.matmul %94, %95, %cst_34 {dimension_numbers = #tpu.dot_dimension_numbers<[1], [0], [0], [1], [0, 0, 1, 1], [], []>} : vector<1x100xf32>, vector<100x1xf32>, vector<1x1xf32> -> vector<1x1xf32>
    %c0_35 = arith.constant 0 : index
    %c0_36 = arith.constant 0 : index
    %97 = vector.load %arg13[%c0_35, %c0_36] : memref<1x1xf32, #tpu.memory_space<vmem>>, vector<1x1xf32>
    %98 = arith.addf %96, %97 : vector<1x1xf32>
    %99 = vector.shape_cast %98 : vector<1x1xf32> to vector<1x1x1xf32>
    %c0_37 = arith.constant 0 : index
    %c0_38 = arith.constant 0 : index
    %c0_39 = arith.constant 0 : index
    %100 = vector.load %arg14[%c0_37, %c0_38, %c0_39] : memref<1x1x1xf32, #tpu.memory_space<vmem>>, vector<1x1x1xf32>
    tpu.vector_store %arg14[%c0_37, %c0_38, %c0_39], %99 {strides = array<i32>} : memref<1x1x1xf32, #tpu.memory_space<vmem>>, vector<1x1x1xf32>,
    return
  }
  func.func @transform_0(%arg0: i32) -> (i32, i32, i32) {
    %c0_i32 = arith.constant 0 : i32
    %c0_i32_0 = arith.constant 0 : i32
    %c0_i32_1 = arith.constant 0 : i32
    return %arg0, %c0_i32, %c0_i32_0 : i32, i32, i32
  }
  func.func @transform_1(%arg0: i32) -> (i32, i32) {
    %c0_i32 = arith.constant 0 : i32
    %c0_i32_0 = arith.constant 0 : i32
    %c0_i32_1 = arith.constant 0 : i32
    return %c0_i32, %c0_i32_0 : i32, i32
  }
  func.func @transform_2(%arg0: i32) -> (i32, i32) {
    %c0_i32 = arith.constant 0 : i32
    %c0_i32_0 = arith.constant 0 : i32
    %c0_i32_1 = arith.constant 0 : i32
    return %c0_i32, %c0_i32_0 : i32, i32
  }
  func.func @transform_3(%arg0: i32) -> (i32, i32) {
    %c0_i32 = arith.constant 0 : i32
    %c0_i32_0 = arith.constant 0 : i32
    %c0_i32_1 = arith.constant 0 : i32
    return %c0_i32, %c0_i32_0 : i32, i32
  }
  func.func @transform_4(%arg0: i32) -> (i32, i32) {
    %c0_i32 = arith.constant 0 : i32
    %c0_i32_0 = arith.constant 0 : i32
    %c0_i32_1 = arith.constant 0 : i32
    return %c0_i32, %c0_i32_0 : i32, i32
  }
  func.func @transform_5(%arg0: i32) -> (i32, i32) {
    %c0_i32 = arith.constant 0 : i32
    %c0_i32_0 = arith.constant 0 : i32
    %c0_i32_1 = arith.constant 0 : i32
    return %c0_i32, %c0_i32_0 : i32, i32
  }
  func.func @transform_6(%arg0: i32) -> (i32, i32) {
    %c0_i32 = arith.constant 0 : i32
    %c0_i32_0 = arith.constant 0 : i32
    %c0_i32_1 = arith.constant 0 : i32
    return %c0_i32, %c0_i32_0 : i32, i32
  }
  func.func @transform_7(%arg0: i32) -> (i32, i32) {
    %c0_i32 = arith.constant 0 : i32
    %c0_i32_0 = arith.constant 0 : i32
    %c0_i32_1 = arith.constant 0 : i32
    return %c0_i32, %c0_i32_0 : i32, i32
  }
  func.func @transform_8(%arg0: i32) -> (i32, i32) {
    %c0_i32 = arith.constant 0 : i32
    %c0_i32_0 = arith.constant 0 : i32
    %c0_i32_1 = arith.constant 0 : i32
    return %c0_i32, %c0_i32_0 : i32, i32
  }
  func.func @transform_9(%arg0: i32) -> (i32, i32) {
    %c0_i32 = arith.constant 0 : i32
    %c0_i32_0 = arith.constant 0 : i32
    %c0_i32_1 = arith.constant 0 : i32
    return %c0_i32, %c0_i32_0 : i32, i32
  }
  func.func @transform_10(%arg0: i32) -> (i32, i32) {
    %c0_i32 = arith.constant 0 : i32
    %c0_i32_0 = arith.constant 0 : i32
    %c0_i32_1 = arith.constant 0 : i32
    return %c0_i32, %c0_i32_0 : i32, i32
  }
  func.func @transform_11(%arg0: i32) -> (i32, i32) {
    %c0_i32 = arith.constant 0 : i32
    %c0_i32_0 = arith.constant 0 : i32
    %c0_i32_1 = arith.constant 0 : i32
    return %c0_i32, %c0_i32_0 : i32, i32
  }
  func.func @transform_12(%arg0: i32) -> (i32, i32) {
    %c0_i32 = arith.constant 0 : i32
    %c0_i32_0 = arith.constant 0 : i32
    %c0_i32_1 = arith.constant 0 : i32
    return %c0_i32, %c0_i32_0 : i32, i32
  }
  func.func @transform_13(%arg0: i32) -> (i32, i32, i32) {
    %c0_i32 = arith.constant 0 : i32
    %c0_i32_0 = arith.constant 0 : i32
    %c0_i32_1 = arith.constant 0 : i32
    return %arg0, %c0_i32, %c0_i32_0 : i32, i32, i32
  }
}

</mosaic_0001>

<llo_original>
// kernel: eeg_age_net.1
$region0: #{eeg_age_net.1}
  #allocation0 [shape = 'u32[]', space=smem, size = 0x4, offset = 0x4, fixed_abs, tag = 'smem constant byte address 0x4 - core index']
  #allocation1 [shape = 'u32[144,128]{1,0:T(1,128)}', space=vmem, size = 0x12000, scoped, tag = 'internal scratch']
  #allocation2 [shape = 'f32[1,1]{1,0:T(1,128)S(1)}', space=vmem, size = 0x200, scoped, tag = 'scoped memory for eeg_age_net.1']
  %s0 = inlined_call_operand.vmem [shape: f32[2,64,4], index: 0, kind: input, shape index: {}]
  %s1 = inlined_call_operand.vmem [shape: f32[28,32], index: 1, kind: input, shape index: {}]
  %s2 = inlined_call_operand.vmem [shape: f32[1,32], index: 2, kind: input, shape index: {}]
  %s3 = inlined_call_operand.vmem [shape: f32[224,64], index: 3, kind: input, shape index: {}]
  %s4 = inlined_call_operand.vmem [shape: f32[1,64], index: 4, kind: input, shape index: {}]
  %s5 = inlined_call_operand.vmem [shape: f32[192,64], index: 5, kind: input, shape index: {}]
  %s6 = inlined_call_operand.vmem [shape: f32[1,64], index: 6, kind: input, shape index: {}]
  %s7 = inlined_call_operand.vmem [shape: f32[192,64], index: 7, kind: input, shape index: {}]
  %s8 = inlined_call_operand.vmem [shape: f32[1,64], index: 8, kind: input, shape index: {}]
  %s9 = inlined_call_operand.vmem [shape: f32[1792,100], index: 9, kind: input, shape index: {}]
  %s10 = inlined_call_operand.vmem [shape: f32[1,100], index: 10, kind: input, shape index: {}]
  %s11 = inlined_call_operand.vmem [shape: f32[100,1], index: 11, kind: input, shape index: {}]
  %s12 = inlined_call_operand.<no memory space> [shape: f32[1,1], index: 12, kind: input, shape index: {}]
  %s13 = inlined_call_operand.vmem [shape: f32[2,1,1], index: 13, kind: output, shape index: {}]
  %s14 = sld [smem:[#allocation0]]
  $region85: #{eeg_age_net.1} parent=0
    _
  %s16 = ssub.s32 1, %s14
  %s17 = scalar_select 0, %s16, %s14
  %v18 = vstv %s12
  %19 = vst [vmem:[#allocation2] sm:$0x1] %v18
  loop: start=0, step=1, limit=4
  $region2: #{eeg_age_net.1} parent=0 // loop_pre_header
    _
  $region3: #{eeg_age_net.1} parent=0 // loop_header
    %s21 = sphi 0, %s25
    %p22 = scmp.ge.s32.totalorder %s21, 4
    %s31 = sphi 0, %s33
    %s34 = sphi 0, %s31
    %s35 = sphi 0, %s34
    %s51 = sphi 0, %s35
    %s55 = sphi 0, %s55
    %s57 = sphi 0, %s55
    %s58 = sphi 0, %s57
    %s72 = sphi 0, %s58
    %s76 = sphi 0, %s76
    %s78 = sphi 0, %s76
    %s79 = sphi 0, %s78
    %s93 = sphi 0, %s79
    %s97 = sphi 0, %s97
    %s99 = sphi 0, %s97
    %s100 = sphi 0, %s99
    %s114 = sphi 0, %s100
    %s118 = sphi 0, %s118
    %s120 = sphi 0, %s118
    %s121 = sphi 0, %s120
    %s135 = sphi 0, %s121
    %s139 = sphi 0, %s139
    %s141 = sphi 0, %s139
    %s142 = sphi 0, %s141
    %s156 = sphi 0, %s142
    %s160 = sphi 0, %s160
    %s162 = sphi 0, %s160
    %s163 = sphi 0, %s162
    %s177 = sphi 0, %s163
    %s181 = sphi 0, %s181
    %s183 = sphi 0, %s181
    %s184 = sphi 0, %s183
    %s198 = sphi 0, %s184
    %s202 = sphi 0, %s202
    %s204 = sphi 0, %s202
    %s205 = sphi 0, %s204
    %s219 = sphi 0, %s205
    %s223 = sphi 0, %s223
    %s225 = sphi 0, %s223
    %s226 = sphi 0, %s225
    %s240 = sphi 0, %s226
    %s244 = sphi 0, %s244
    %s246 = sphi 0, %s244
    %s247 = sphi 0, %s246
    %s261 = sphi 0, %s247
    %s265 = sphi 0, %s265
    %s267 = sphi 0, %s265
    %s268 = sphi 0, %s267
    %s282 = sphi 0, %s268
    %s286 = sphi 0, %s286
    %s288 = sphi 0, %s286
    %s289 = sphi 0, %s288
    %s303 = sphi 0, %s289
    %s309 = sphi 0, %s311
    %s312 = sphi 0, %s309
    %s313 = sphi 0, %s312
    %s329 = sphi 0, %s313
  $region4: #{eeg_age_net.1} parent=0 // loop_header_branch
    %24 = sbr.rel (%p22) target = $region8
  $region5: #{eeg_age_net.1} parent=0 // loop_body
    %s26 = ssub.s32 %s21, 1
    %s27 = ssub.s32 %s21, 2
    %s28 = sadd.s32 %s21, 1
    %s29 = ssub.s32 %s21, %s28
    %p30 = scmp.eq.s32.totalorder %s29, 0
    %s32 = sadd.s32 %s31, 1
    %s33 = scalar_select %p30, %s31, %s32
    %p36 = pneg %p30
    %p37 = scmp.eq.s32.totalorder %s21, 1
    %p38 = por %p36, %p37
    %p39 = scmp.ne.s32.totalorder %s31, %s34
    %p40 = scmp.eq.s32.totalorder %s21, 0
    %p41 = por %p39, %p40
    %p42 = scmp.ne.s32.totalorder %s31, %s34
    %p43 = scmp.eq.s32.totalorder %s26, 1
    %p44 = por %p42, %p43
    %p45 = scmp.ne.s32.totalorder %s34, %s35
    %p46 = scmp.eq.s32.totalorder %s26, 0
    %p47 = por %p45, %p46
    %p48 = scmp.ne.s32.totalorder %s34, %s35
    %p49 = scmp.eq.s32.totalorder %s27, 1
    %p50 = por %p48, %p49
    %p52 = scmp.ne.s32.totalorder %s35, %s51
    %p53 = scmp.eq.s32.totalorder %s27, 0
    %p54 = por %p52, %p53
    %s56 = sadd.s32 %s55, 1
    %p59 = scmp.eq.s32.totalorder %s21, 1
    %p60 = scmp.ne.s32.totalorder %s55, %s57
    %p61 = scmp.eq.s32.totalorder %s21, 0
    %p62 = por %p60, %p61
    %p63 = scmp.ne.s32.totalorder %s55, %s57
    %p64 = scmp.eq.s32.totalorder %s26, 1
    %p65 = por %p63, %p64
    %p66 = scmp.ne.s32.totalorder %s57, %s58
    %p67 = scmp.eq.s32.totalorder %s26, 0
    %p68 = por %p66, %p67
    %p69 = scmp.ne.s32.totalorder %s57, %s58
    %p70 = scmp.eq.s32.totalorder %s27, 1
    %p71 = por %p69, %p70
    %p73 = scmp.ne.s32.totalorder %s58, %s72
    %p74 = scmp.eq.s32.totalorder %s27, 0
    %p75 = por %p73, %p74
    %s77 = sadd.s32 %s76, 1
    %p80 = scmp.eq.s32.totalorder %s21, 1
    %p81 = scmp.ne.s32.totalorder %s76, %s78
    %p82 = scmp.eq.s32.totalorder %s21, 0
    %p83 = por %p81, %p82
    %p84 = scmp.ne.s32.totalorder %s76, %s78
    %p85 = scmp.eq.s32.totalorder %s26, 1
    %p86 = por %p84, %p85
    %p87 = scmp.ne.s32.totalorder %s78, %s79
    %p88 = scmp.eq.s32.totalorder %s26, 0
    %p89 = por %p87, %p88
    %p90 = scmp.ne.s32.totalorder %s78, %s79
    %p91 = scmp.eq.s32.totalorder %s27, 1
    %p92 = por %p90, %p91
    %p94 = scmp.ne.s32.totalorder %s79, %s93
    %p95 = scmp.eq.s32.totalorder %s27, 0
    %p96 = por %p94, %p95
    %s98 = sadd.s32 %s97, 1
    %p101 = scmp.eq.s32.totalorder %s21, 1
    %p102 = scmp.ne.s32.totalorder %s97, %s99
    %p103 = scmp.eq.s32.totalorder %s21, 0
    %p104 = por %p102, %p103
    %p105 = scmp.ne.s32.totalorder %s97, %s99
    %p106 = scmp.eq.s32.totalorder %s26, 1
    %p107 = por %p105, %p106
    %p108 = scmp.ne.s32.totalorder %s99, %s100
    %p109 = scmp.eq.s32.totalorder %s26, 0
    %p110 = por %p108, %p109
    %p111 = scmp.ne.s32.totalorder %s99, %s100
    %p112 = scmp.eq.s32.totalorder %s27, 1
    %p113 = por %p111, %p112
    %p115 = scmp.ne.s32.totalorder %s100, %s114
    %p116 = scmp.eq.s32.totalorder %s27, 0
    %p117 = por %p115, %p116
    %s119 = sadd.s32 %s118, 1
    %p122 = scmp.eq.s32.totalorder %s21, 1
    %p123 = scmp.ne.s32.totalorder %s118, %s120
    %p124 = scmp.eq.s32.totalorder %s21, 0
    %p125 = por %p123, %p124
    %p126 = scmp.ne.s32.totalorder %s118, %s120
    %p127 = scmp.eq.s32.totalorder %s26, 1
    %p128 = por %p126, %p127
    %p129 = scmp.ne.s32.totalorder %s120, %s121
    %p130 = scmp.eq.s32.totalorder %s26, 0
    %p131 = por %p129, %p130
    %p132 = scmp.ne.s32.totalorder %s120, %s121
    %p133 = scmp.eq.s32.totalorder %s27, 1
    %p134 = por %p132, %p133
    %p136 = scmp.ne.s32.totalorder %s121, %s135
    %p137 = scmp.eq.s32.totalorder %s27, 0
    %p138 = por %p136, %p137
    %s140 = sadd.s32 %s139, 1
    %p143 = scmp.eq.s32.totalorder %s21, 1
    %p144 = scmp.ne.s32.totalorder %s139, %s141
    %p145 = scmp.eq.s32.totalorder %s21, 0
    %p146 = por %p144, %p145
    %p147 = scmp.ne.s32.totalorder %s139, %s141
    %p148 = scmp.eq.s32.totalorder %s26, 1
    %p149 = por %p147, %p148
    %p150 = scmp.ne.s32.totalorder %s141, %s142
    %p151 = scmp.eq.s32.totalorder %s26, 0
    %p152 = por %p150, %p151
    %p153 = scmp.ne.s32.totalorder %s141, %s142
    %p154 = scmp.eq.s32.totalorder %s27, 1
    %p155 = por %p153, %p154
    %p157 = scmp.ne.s32.totalorder %s142, %s156
    %p158 = scmp.eq.s32.totalorder %s27, 0
    %p159 = por %p157, %p158
    %s161 = sadd.s32 %s160, 1
    %p164 = scmp.eq.s32.totalorder %s21, 1
    %p165 = scmp.ne.s32.totalorder %s160, %s162
    %p166 = scmp.eq.s32.totalorder %s21, 0
    %p167 = por %p165, %p166
    %p168 = scmp.ne.s32.totalorder %s160, %s162
    %p169 = scmp.eq.s32.totalorder %s26, 1
    %p170 = por %p168, %p169
    %p171 = scmp.ne.s32.totalorder %s162, %s163
    %p172 = scmp.eq.s32.totalorder %s26, 0
    %p173 = por %p171, %p172
    %p174 = scmp.ne.s32.totalorder %s162, %s163
    %p175 = scmp.eq.s32.totalorder %s27, 1
    %p176 = por %p174, %p175
    %p178 = scmp.ne.s32.totalorder %s163, %s177
    %p179 = scmp.eq.s32.totalorder %s27, 0
    %p180 = por %p178, %p179
    %s182 = sadd.s32 %s181, 1
    %p185 = scmp.eq.s32.totalorder %s21, 1
    %p186 = scmp.ne.s32.totalorder %s181, %s183
    %p187 = scmp.eq.s32.totalorder %s21, 0
    %p188 = por %p186, %p187
    %p189 = scmp.ne.s32.totalorder %s181, %s183
    %p190 = scmp.eq.s32.totalorder %s26, 1
    %p191 = por %p189, %p190
    %p192 = scmp.ne.s32.totalorder %s183, %s184
    %p193 = scmp.eq.s32.totalorder %s26, 0
    %p194 = por %p192, %p193
    %p195 = scmp.ne.s32.totalorder %s183, %s184
    %p196 = scmp.eq.s32.totalorder %s27, 1
    %p197 = por %p195, %p196
    %p199 = scmp.ne.s32.totalorder %s184, %s198
    %p200 = scmp.eq.s32.totalorder %s27, 0
    %p201 = por %p199, %p200
    %s203 = sadd.s32 %s202, 1
    %p206 = scmp.eq.s32.totalorder %s21, 1
    %p207 = scmp.ne.s32.totalorder %s202, %s204
    %p208 = scmp.eq.s32.totalorder %s21, 0
    %p209 = por %p207, %p208
    %p210 = scmp.ne.s32.totalorder %s202, %s204
    %p211 = scmp.eq.s32.totalorder %s26, 1
    %p212 = por %p210, %p211
    %p213 = scmp.ne.s32.totalorder %s204, %s205
    %p214 = scmp.eq.s32.totalorder %s26, 0
    %p215 = por %p213, %p214
    %p216 = scmp.ne.s32.totalorder %s204, %s205
    %p217 = scmp.eq.s32.totalorder %s27, 1
    %p218 = por %p216, %p217
    %p220 = scmp.ne.s32.totalorder %s205, %s219
    %p221 = scmp.eq.s32.totalorder %s27, 0
    %p222 = por %p220, %p221
    %s224 = sadd.s32 %s223, 1
    %p227 = scmp.eq.s32.totalorder %s21, 1
    %p228 = scmp.ne.s32.totalorder %s223, %s225
    %p229 = scmp.eq.s32.totalorder %s21, 0
    %p230 = por %p228, %p229
    %p231 = scmp.ne.s32.totalorder %s223, %s225
    %p232 = scmp.eq.s32.totalorder %s26, 1
    %p233 = por %p231, %p232
    %p234 = scmp.ne.s32.totalorder %s225, %s226
    %p235 = scmp.eq.s32.totalorder %s26, 0
    %p236 = por %p234, %p235
    %p237 = scmp.ne.s32.totalorder %s225, %s226
    %p238 = scmp.eq.s32.totalorder %s27, 1
    %p239 = por %p237, %p238
    %p241 = scmp.ne.s32.totalorder %s226, %s240
    %p242 = scmp.eq.s32.totalorder %s27, 0
    %p243 = por %p241, %p242
    %s245 = sadd.s32 %s244, 1
    %p248 = scmp.eq.s32.totalorder %s21, 1
    %p249 = scmp.ne.s32.totalorder %s244, %s246
    %p250 = scmp.eq.s32.totalorder %s21, 0
    %p251 = por %p249, %p250
    %p252 = scmp.ne.s32.totalorder %s244, %s246
    %p253 = scmp.eq.s32.totalorder %s26, 1
    %p254 = por %p252, %p253
    %p255 = scmp.ne.s32.totalorder %s246, %s247
    %p256 = scmp.eq.s32.totalorder %s26, 0
    %p257 = por %p255, %p256
    %p258 = scmp.ne.s32.totalorder %s246, %s247
    %p259 = scmp.eq.s32.totalorder %s27, 1
    %p260 = por %p258, %p259
    %p262 = scmp.ne.s32.totalorder %s247, %s261
    %p263 = scmp.eq.s32.totalorder %s27, 0
    %p264 = por %p262, %p263
    %s266 = sadd.s32 %s265, 1
    %p269 = scmp.eq.s32.totalorder %s21, 1
    %p270 = scmp.ne.s32.totalorder %s265, %s267
    %p271 = scmp.eq.s32.totalorder %s21, 0
    %p272 = por %p270, %p271
    %p273 = scmp.ne.s32.totalorder %s265, %s267
    %p274 = scmp.eq.s32.totalorder %s26, 1
    %p275 = por %p273, %p274
    %p276 = scmp.ne.s32.totalorder %s267, %s268
    %p277 = scmp.eq.s32.totalorder %s26, 0
    %p278 = por %p276, %p277
    %p279 = scmp.ne.s32.totalorder %s267, %s268
    %p280 = scmp.eq.s32.totalorder %s27, 1
    %p281 = por %p279, %p280
    %p283 = scmp.ne.s32.totalorder %s268, %s282
    %p284 = scmp.eq.s32.totalorder %s27, 0
    %p285 = por %p283, %p284
    %s287 = sadd.s32 %s286, 1
    %p290 = scmp.eq.s32.totalorder %s21, 1
    %p291 = scmp.ne.s32.totalorder %s286, %s288
    %p292 = scmp.eq.s32.totalorder %s21, 0
    %p293 = por %p291, %p292
    %p294 = scmp.ne.s32.totalorder %s286, %s288
    %p295 = scmp.eq.s32.totalorder %s26, 1
    %p296 = por %p294, %p295
    %p297 = scmp.ne.s32.totalorder %s288, %s289
    %p298 = scmp.eq.s32.totalorder %s26, 0
    %p299 = por %p297, %p298
    %p300 = scmp.ne.s32.totalorder %s288, %s289
    %p301 = scmp.eq.s32.totalorder %s27, 1
    %p302 = por %p300, %p301
    %p304 = scmp.ne.s32.totalorder %s289, %s303
    %p305 = scmp.eq.s32.totalorder %s27, 0
    %p306 = por %p304, %p305
    %s307 = ssub.s32 %s21, %s28
    %p308 = scmp.eq.s32.totalorder %s307, 0
    %s310 = sadd.s32 %s309, 1
    %s311 = scalar_select %p308, %s309, %s310
    %p314 = pneg %p308
    %p315 = scmp.eq.s32.totalorder %s21, 1
    %p316 = por %p314, %p315
    %p317 = scmp.ne.s32.totalorder %s309, %s312
    %p318 = scmp.eq.s32.totalorder %s21, 0
    %p319 = por %p317, %p318
    %p320 = scmp.ne.s32.totalorder %s309, %s312
    %p321 = scmp.eq.s32.totalorder %s26, 1
    %p322 = por %p320, %p321
    %p323 = scmp.ne.s32.totalorder %s312, %s313
    %p324 = scmp.eq.s32.totalorder %s26, 0
    %p325 = por %p323, %p324
    %p326 = scmp.ne.s32.totalorder %s312, %s313
    %p327 = scmp.eq.s32.totalorder %s27, 1
    %p328 = por %p326, %p327
    %p330 = scmp.ne.s32.totalorder %s313, %s329
    %p331 = scmp.eq.s32.totalorder %s27, 0
    %p332 = por %p330, %p331
    %p333 = scmp.le.s32.totalorder 1, %s21
    %p334 = scmp.lt.s32.totalorder %s21, 3
    %p335 = pnand %p333, %p334
    %p336 = pneg %p335
    // Predicated region
    $region9: #{eeg_age_net.1} parent=5 // pred_check
      _
    $region10: #{eeg_age_net.1} parent=5 // pred_check_branch
      %338 = sbr.rel (%p335) target = $region12
    $region11: #{eeg_age_net.1} parent=5 // pred_region
      %s339 = ssub.s32 %s21, 1
      // Predicated region
      $region13: #{eeg_age_net.1} parent=11 // pred_check
        %p340 = pneg %p68
      $region14: #{eeg_age_net.1} parent=11 // pred_check_branch
        %342 = sbr.rel (%p340) target = $region16
      $region15: #{eeg_age_net.1} parent=11 // pred_region
        _
      $region16: #{eeg_age_net.1} parent=11 // pred_fallthru
        _
      // Predicated region
      $region17: #{eeg_age_net.1} parent=11 // pred_check
        %p343 = pneg %p89
      $region18: #{eeg_age_net.1} parent=11 // pred_check_branch
        %345 = sbr.rel (%p343) target = $region20
      $region19: #{eeg_age_net.1} parent=11 // pred_region
        _
      $region20: #{eeg_age_net.1} parent=11 // pred_fallthru
        _
      // Predicated region
      $region21: #{eeg_age_net.1} parent=11 // pred_check
        %p346 = pneg %p110
      $region22: #{eeg_age_net.1} parent=11 // pred_check_branch
        %348 = sbr.rel (%p346) target = $region24
      $region23: #{eeg_age_net.1} parent=11 // pred_region
        _
      $region24: #{eeg_age_net.1} parent=11 // pred_fallthru
        _
      // Predicated region
      $region25: #{eeg_age_net.1} parent=11 // pred_check
        %p349 = pneg %p131
      $region26: #{eeg_age_net.1} parent=11 // pred_check_branch
        %351 = sbr.rel (%p349) target = $region28
      $region27: #{eeg_age_net.1} parent=11 // pred_region
        _
      $region28: #{eeg_age_net.1} parent=11 // pred_fallthru
        _
      // Predicated region
      $region29: #{eeg_age_net.1} parent=11 // pred_check
        %p352 = pneg %p152
      $region30: #{eeg_age_net.1} parent=11 // pred_check_branch
        %354 = sbr.rel (%p352) target = $region32
      $region31: #{eeg_age_net.1} parent=11 // pred_region
        _
      $region32: #{eeg_age_net.1} parent=11 // pred_fallthru
        _
      // Predicated region
      $region33: #{eeg_age_net.1} parent=11 // pred_check
        %p355 = pneg %p173
      $region34: #{eeg_age_net.1} parent=11 // pred_check_branch
        %357 = sbr.rel (%p355) target = $region36
      $region35: #{eeg_age_net.1} parent=11 // pred_region
        _
      $region36: #{eeg_age_net.1} parent=11 // pred_fallthru
        _
      // Predicated region
      $region37: #{eeg_age_net.1} parent=11 // pred_check
        %p358 = pneg %p194
      $region38: #{eeg_age_net.1} parent=11 // pred_check_branch
        %360 = sbr.rel (%p358) target = $region40
      $region39: #{eeg_age_net.1} parent=11 // pred_region
        _
      $region40: #{eeg_age_net.1} parent=11 // pred_fallthru
        _
      // Predicated region
      $region41: #{eeg_age_net.1} parent=11 // pred_check
        %p361 = pneg %p215
      $region42: #{eeg_age_net.1} parent=11 // pred_check_branch
        %363 = sbr.rel (%p361) target = $region44
      $region43: #{eeg_age_net.1} parent=11 // pred_region
        _
      $region44: #{eeg_age_net.1} parent=11 // pred_fallthru
        _
      // Predicated region
      $region45: #{eeg_age_net.1} parent=11 // pred_check
        %p364 = pneg %p236
      $region46: #{eeg_age_net.1} parent=11 // pred_check_branch
        %366 = sbr.rel (%p364) target = $region48
      $region47: #{eeg_age_net.1} parent=11 // pred_region
        _
      $region48: #{eeg_age_net.1} parent=11 // pred_fallthru
        _
      // Predicated region
      $region49: #{eeg_age_net.1} parent=11 // pred_check
        %p367 = pneg %p257
      $region50: #{eeg_age_net.1} parent=11 // pred_check_branch
        %369 = sbr.rel (%p367) target = $region52
      $region51: #{eeg_age_net.1} parent=11 // pred_region
        _
      $region52: #{eeg_age_net.1} parent=11 // pred_fallthru
        _
      // Predicated region
      $region53: #{eeg_age_net.1} parent=11 // pred_check
        %p370 = pneg %p278
      $region54: #{eeg_age_net.1} parent=11 // pred_check_branch
        %372 = sbr.rel (%p370) target = $region56
      $region55: #{eeg_age_net.1} parent=11 // pred_region
        _
      $region56: #{eeg_age_net.1} parent=11 // pred_fallthru
        _
      // Predicated region
      $region57: #{eeg_age_net.1} parent=11 // pred_check
        %p373 = pneg %p299
      $region58: #{eeg_age_net.1} parent=11 // pred_check_branch
        %375 = sbr.rel (%p373) target = $region60
      $region59: #{eeg_age_net.1} parent=11 // pred_region
        _
      $region60: #{eeg_age_net.1} parent=11 // pred_fallthru
        _
    $region12: #{eeg_age_net.1} parent=5 // pred_fallthru
      _
    %p376 = scmp.lt.s32.totalorder %s21, 2
    // Predicated region
    $region61: #{eeg_age_net.1} parent=5 // pred_check
      %p377 = pneg %p376
    $region62: #{eeg_age_net.1} parent=5 // pred_check_branch
      %379 = sbr.rel (%p377) target = $region64
    $region63: #{eeg_age_net.1} parent=5 // pred_region
      // Predicated region
      $region65: #{eeg_age_net.1} parent=63 // pred_check
        %p380 = pneg %p41
      $region66: #{eeg_age_net.1} parent=63 // pred_check_branch
        %382 = sbr.rel (%p380) target = $region68
      $region67: #{eeg_age_net.1} parent=63 // pred_region
        %p383 = scmp.lt.s32.totalorder %s21, 1
        %s384 = scalar_select %p383, %s21, 1
        %s385 = smul.addr %s384, 8
        %s386 = smul.addr %s385, 8
        %s387 = scalar_lea.vmem %s0, %s386
      $region68: #{eeg_age_net.1} parent=63 // pred_fallthru
        _
    $region64: #{eeg_age_net.1} parent=5 // pred_fallthru
      _
    %p388 = scmp.le.s32.totalorder 1, %s21
    %p389 = scmp.lt.s32.totalorder %s21, 3
    %p390 = pnand %p388, %p389
    %p391 = pneg %p390
    // Predicated region
    $region69: #{eeg_age_net.1} parent=5 // pred_check
      _
    $region70: #{eeg_age_net.1} parent=5 // pred_check_branch
      %393 = sbr.rel (%p390) target = $region72
    $region71: #{eeg_age_net.1} parent=5 // pred_region
      %s394 = ssub.s32 %s21, 1
      %p395 = scmp.lt.s32.totalorder %s26, 1
      %s396 = scalar_select %p395, %s26, 1
      %s397 = smul.addr %s396, 8
      %s398 = smul.addr %s397, 8
      %s399 = scalar_lea.vmem %s0, %s398
      %p400 = pneg %p47
      %p401 = pneg %p44
      %p402 = pneg %p68
      %p403 = pneg %p65
      %p404 = pneg %p89
      %p405 = pneg %p86
      %p406 = pneg %p110
      %p407 = pneg %p107
      %p408 = pneg %p131
      %p409 = pneg %p128
      %p410 = pneg %p152
      %p411 = pneg %p149
      %p412 = pneg %p173
      %p413 = pneg %p170
      %p414 = pneg %p194
      %p415 = pneg %p191
      %p416 = pneg %p215
      %p417 = pneg %p212
      %p418 = pneg %p236
      %p419 = pneg %p233
      %p420 = pneg %p257
      %p421 = pneg %p254
      %p422 = pneg %p278
      %p423 = pneg %p275
      %p424 = pneg %p299
      %p425 = pneg %p296
      %p426 = pneg %p325
      %p427 = pneg %p322
      %p428 = scmp.lt.s32.totalorder %s26, 1
      %s429 = scalar_select %p428, %s26, 1
      %s430 = scalar_lea.vmem %s13, %s429
      %p431 = scmp.lt.s32.totalorder %s26, 1
      %s432 = scalar_select %p431, %s26, 1
      %s433 = smul.addr %s432, 8
      %s434 = smul.addr %s433, 8
      %s435 = scalar_lea.vmem %s0, %s434
      %p436 = scmp.lt.s32.totalorder %s26, 1
      %s437 = scalar_select %p436, %s26, 1
      %s438 = scalar_lea.vmem %s13, %s437
      %v439 = vld [vmem:[%s435] sm:$0xff]
      %v440 = vld [vmem:[%s435 + $0x8] sm:$0xff]
      %v441 = vld [vmem:[%s435 + $0x10] sm:$0xff]
      %v442 = vld [vmem:[%s435 + $0x18] sm:$0xff]
      %v443 = vld [vmem:[%s435 + $0x20] sm:$0xff]
      %v444 = vld [vmem:[%s435 + $0x28] sm:$0xff]
      %v445 = vld [vmem:[%s435 + $0x30] sm:$0xff]
      %v446 = vld [vmem:[%s435 + $0x38] sm:$0xff]
      %vm454 = vcmask 1044480
      %v455 = vrot.slane %v439, 3
      %v456 = vrot.slane %v440, 3
      %v457 = vsel %vm454, %v455, %v456
      %v458 = vrot.slane %v441, 3
      %v459 = vsel %vm454, %v456, %v458
      %v460 = vrot.slane %v442, 3
      %v461 = vsel %vm454, %v458, %v460
      %v462 = vrot.slane %v443, 3
      %v463 = vsel %vm454, %v460, %v462
      %v464 = vrot.slane %v444, 3
      %v465 = vsel %vm454, %v462, %v464
      %v466 = vrot.slane %v445, 3
      %v467 = vsel %vm454, %v464, %v466
      %468 = vrot.lane.b32.xlu0 %v457, 4
      %v469 = vpop.permute.xlu0 %468
      %470 = vrot.lane.b32.xlu0 %v459, 4
      %v471 = vpop.permute.xlu0 %470
      %472 = vrot.lane.b32.xlu0 %v461, 4
      %v473 = vpop.permute.xlu0 %472
      %474 = vrot.lane.b32.xlu0 %v463, 4
      %v475 = vpop.permute.xlu0 %474
      %476 = vrot.lane.b32.xlu0 %v465, 4
      %v477 = vpop.permute.xlu0 %476
      %478 = vrot.lane.b32.xlu0 %v467, 4
      %v479 = vpop.permute.xlu0 %478
      %vm486 = vcmask 1041408
      %v487 = vrot.slane %v439, 6
      %v488 = vrot.slane %v440, 6
      %v489 = vsel %vm486, %v487, %v488
      %v490 = vrot.slane %v441, 6
      %v491 = vsel %vm486, %v488, %v490
      %v492 = vrot.slane %v442, 6
      %v493 = vsel %vm486, %v490, %v492
      %v494 = vrot.slane %v443, 6
      %v495 = vsel %vm486, %v492, %v494
      %v496 = vrot.slane %v444, 6
      %v497 = vsel %vm486, %v494, %v496
      %v498 = vrot.slane %v445, 6
      %v499 = vsel %vm486, %v496, %v498
      %500 = vrot.lane.b32.xlu0 %v489, 8
      %v501 = vpop.permute.xlu0 %500
      %502 = vrot.lane.b32.xlu0 %v491, 8
      %v503 = vpop.permute.xlu0 %502
      %504 = vrot.lane.b32.xlu0 %v493, 8
      %v505 = vpop.permute.xlu0 %504
      %506 = vrot.lane.b32.xlu0 %v495, 8
      %v507 = vpop.permute.xlu0 %506
      %508 = vrot.lane.b32.xlu0 %v497, 8
      %v509 = vpop.permute.xlu0 %508
      %510 = vrot.lane.b32.xlu0 %v499, 8
      %v511 = vpop.permute.xlu0 %510
      %vm518 = vcmask 1046528
      %v519 = vrot.slane %v440, 1
      %v520 = vrot.slane %v441, 1
      %v521 = vsel %vm518, %v519, %v520
      %v522 = vrot.slane %v442, 1
      %v523 = vsel %vm518, %v520, %v522
      %v524 = vrot.slane %v443, 1
      %v525 = vsel %vm518, %v522, %v524
      %v526 = vrot.slane %v444, 1
      %v527 = vsel %vm518, %v524, %v526
      %v528 = vrot.slane %v445, 1
      %v529 = vsel %vm518, %v526, %v528
      %530 = vrot.lane.b32.xlu0 %v521, 12
      %v531 = vpop.permute.xlu0 %530
      %532 = vrot.lane.b32.xlu0 %v523, 12
      %v533 = vpop.permute.xlu0 %532
      %534 = vrot.lane.b32.xlu0 %v525, 12
      %v535 = vpop.permute.xlu0 %534
      %536 = vrot.lane.b32.xlu0 %v527, 12
      %v537 = vpop.permute.xlu0 %536
      %538 = vrot.lane.b32.xlu0 %v529, 12
      %v539 = vpop.permute.xlu0 %538
      %540 = vrot.lane.b32.xlu0 %v528, 12
      %v541 = vpop.permute.xlu0 %540
      %vm549 = vcmask 1043456
      %v550 = vrot.slane %v440, 4
      %v551 = vrot.slane %v441, 4
      %v552 = vsel %vm549, %v550, %v551
      %v553 = vrot.slane %v442, 4
      %v554 = vsel %vm549, %v551, %v553
      %v555 = vrot.slane %v443, 4
      %v556 = vsel %vm549, %v553, %v555
      %v557 = vrot.slane %v444, 4
      %v558 = vsel %vm549, %v555, %v557
      %v559 = vrot.slane %v445, 4
      %v560 = vsel %vm549, %v557, %v559
      %v561 = vrot.slane %v446, 4
      %v562 = vsel %vm549, %v559, %v561
      %563 = vrot.lane.b32.xlu0 %v552, 16
      %v564 = vpop.permute.xlu0 %563
      %565 = vrot.lane.b32.xlu0 %v554, 16
      %v566 = vpop.permute.xlu0 %565
      %567 = vrot.lane.b32.xlu0 %v556, 16
      %v568 = vpop.permute.xlu0 %567
      %569 = vrot.lane.b32.xlu0 %v558, 16
      %v570 = vpop.permute.xlu0 %569
      %571 = vrot.lane.b32.xlu0 %v560, 16
      %v572 = vpop.permute.xlu0 %571
      %573 = vrot.lane.b32.xlu0 %v562, 16
      %v574 = vpop.permute.xlu0 %573
      %vm581 = vcmask 1040384
      %v582 = vrot.slane %v440, 7
      %v583 = vrot.slane %v441, 7
      %v584 = vsel %vm581, %v582, %v583
      %v585 = vrot.slane %v442, 7
      %v586 = vsel %vm581, %v583, %v585
      %v587 = vrot.slane %v443, 7
      %v588 = vsel %vm581, %v585, %v587
      %v589 = vrot.slane %v444, 7
      %v590 = vsel %vm581, %v587, %v589
      %v591 = vrot.slane %v445, 7
      %v592 = vsel %vm581, %v589, %v591
      %v593 = vrot.slane %v446, 7
      %v594 = vsel %vm581, %v591, %v593
      %595 = vrot.lane.b32.xlu0 %v584, 20
      %v596 = vpop.permute.xlu0 %595
      %597 = vrot.lane.b32.xlu0 %v586, 20
      %v598 = vpop.permute.xlu0 %597
      %599 = vrot.lane.b32.xlu0 %v588, 20
      %v600 = vpop.permute.xlu0 %599
      %601 = vrot.lane.b32.xlu0 %v590, 20
      %v602 = vpop.permute.xlu0 %601
      %603 = vrot.lane.b32.xlu0 %v592, 20
      %v604 = vpop.permute.xlu0 %603
      %605 = vrot.lane.b32.xlu0 %v594, 20
      %v606 = vpop.permute.xlu0 %605
      %vm613 = vcmask 1045504
      %v614 = vrot.slane %v441, 2
      %v615 = vrot.slane %v442, 2
      %v616 = vsel %vm613, %v614, %v615
      %v617 = vrot.slane %v443, 2
      %v618 = vsel %vm613, %v615, %v617
      %v619 = vrot.slane %v444, 2
      %v620 = vsel %vm613, %v617, %v619
      %v621 = vrot.slane %v445, 2
      %v622 = vsel %vm613, %v619, %v621
      %v623 = vrot.slane %v446, 2
      %v624 = vsel %vm613, %v621, %v623
      %625 = vrot.lane.b32.xlu0 %v616, 24
      %v626 = vpop.permute.xlu0 %625
      %627 = vrot.lane.b32.xlu0 %v618, 24
      %v628 = vpop.permute.xlu0 %627
      %629 = vrot.lane.b32.xlu0 %v620, 24
      %v630 = vpop.permute.xlu0 %629
      %631 = vrot.lane.b32.xlu0 %v622, 24
      %v632 = vpop.permute.xlu0 %631
      %633 = vrot.lane.b32.xlu0 %v624, 24
      %v634 = vpop.permute.xlu0 %633
      %635 = vrot.lane.b32.xlu0 %v623, 24
      %v636 = vpop.permute.xlu0 %635
      %vm643 = vcmask 31744
      %v644 = vsel %vm643, %v439, %v469
      %v645 = vsel %vm643, %v440, %v471
      %v646 = vsel %vm643, %v441, %v473
      %v647 = vsel %vm643, %v442, %v475
      %v648 = vsel %vm643, %v443, %v477
      %v649 = vsel %vm643, %v444, %v479
      %vm650 = vcmask 64512
      %v651 = vsel %vm650, %v644, %v501
      %v652 = vsel %vm650, %v645, %v503
      %v653 = vsel %vm650, %v646, %v505
      %v654 = vsel %vm650, %v647, %v507
      %v655 = vsel %vm650, %v648, %v509
      %v656 = vsel %vm650, %v649, %v511
      %vm657 = vcmask 97280
      %v658 = vsel %vm657, %v651, %v531
      %v659 = vsel %vm657, %v652, %v533
      %v660 = vsel %vm657, %v653, %v535
      %v661 = vsel %vm657, %v654, %v537
      %v662 = vsel %vm657, %v655, %v539
      %v663 = vsel %vm657, %v656, %v541
      %vm664 = vcmask 130048
      %v665 = vsel %vm664, %v658, %v564
      %v666 = vsel %vm664, %v659, %v566
      %v667 = vsel %vm664, %v660, %v568
      %v668 = vsel %vm664, %v661, %v570
      %v669 = vsel %vm664, %v662, %v572
      %v670 = vsel %vm664, %v663, %v574
      %vm671 = vcmask 162816
      %v672 = vsel %vm671, %v665, %v596
      %v673 = vsel %vm671, %v666, %v598
      %v674 = vsel %vm671, %v667, %v600
      %v675 = vsel %vm671, %v668, %v602
      %v676 = vsel %vm671, %v669, %v604
      %v677 = vsel %vm671, %v670, %v606
      %vm678 = vcmask 195584
      %v679 = vsel %vm678, %v672, %v626
      %v680 = vsel %vm678, %v673, %v628
      %v681 = vsel %vm678, %v674, %v630
      %v682 = vsel %vm678, %v675, %v632
      %v683 = vsel %vm678, %v676, %v634
      %v684 = vsel %vm678, %v677, %v636
      %v685 = vld [vmem:[%s1] sm:$0xff]
      %v686 = vld [vmem:[%s1 + $0x8] sm:$0xff]
      %v687 = vld [vmem:[%s1 + $0x10] sm:$0xff]
      %v688 = vld [vmem:[%s1 + $0x18] sm:$0xf]
      %v689 = vld [vmem:[%s2] sm:$0x1]
      %v691 = vlaneseq
      %v692 = vshrl.u32 %v691, 7
      %v693 = vsub.s32 0, %v692
      %v694 = vrot.slane %v689, %v693
      %vm696 = vcmask 228352
      %v698 = vsel %vm696, %v679, 0
      %v701 = vsel %vm696, %v680, 0
      %v704 = vsel %vm696, %v681, 0
      %v707 = vsel %vm696, %v682, 0
      %v710 = vsel %vm696, %v683, 0
      %v713 = vsel %vm696, %v684, 0
      %v716 = vsel %vm549, %v688, 0
      %718 = vmatprep.subr.mxu0 0.0
      %719 = vmatpush1.msra.mxu0 0.0
      %720 = vmatprep.subr.mxu0 0.0
      %721 = vmatpush1.msra.mxu0 0.0
      %722 = vmatprep.subr.mxu0 0.0
      %723 = vmatpush1.msra.mxu0 0.0
      %724 = vmatprep.subr.mxu0 0.0
      %725 = vmatpush1.msra.mxu0 0.0
      %726 = vmatprep.subr.mxu0 0.0
      %727 = vmatpush1.msra.mxu0 0.0
      %728 = vmatprep.subr.mxu0 0.0
      %729 = vmatpush1.msra.mxu0 0.0
      %730 = vmatprep.subr.mxu0 0.0
      %731 = vmatpush1.msra.mxu0 0.0
      %732 = vmatprep.subr.mxu0 0.0
      %733 = vmatpush1.msra.mxu0 0.0
      %734 = vmatprep.subr.mxu0 0.0
      %735 = vmatpush1.msra.mxu0 0.0
      %736 = vmatprep.subr.mxu0 0.0
      %737 = vmatpush1.msra.mxu0 0.0
      %738 = vmatprep.subr.mxu0 0.0
      %739 = vmatpush1.msra.mxu0 0.0
      %740 = vmatprep.subr.mxu0 0.0
      %741 = vmatpush1.msra.mxu0 0.0
      %742 = vmatprep.subr.mxu0 0.0
      %743 = vmatpush1.msra.mxu0 %v716
      %744 = vmatprep.subr.mxu0 0.0
      %745 = vmatpush1.msra.mxu0 %v687
      %746 = vmatprep.subr.mxu0 0.0
      %747 = vmatpush1.msra.mxu0 %v686
      %748 = vmatprep.subr.mxu0 0.0
      %749 = vmatpush1.msra.mxu0 %v685
      %750 = vmatprep.subr.mxu0 0.0
      %751 = vmatpush2.msra.mxu0 0.0
      %752 = vmatprep.subr.mxu0 0.0
      %753 = vmatpush2.msra.mxu0 0.0
      %754 = vmatprep.subr.mxu0 0.0
      %755 = vmatpush2.msra.mxu0 0.0
      %756 = vmatprep.subr.mxu0 0.0
      %757 = vmatpush2.msra.mxu0 0.0
      %758 = vmatprep.subr.mxu0 0.0
      %759 = vmatpush2.msra.mxu0 0.0
      %760 = vmatprep.subr.mxu0 0.0
      %761 = vmatpush2.msra.mxu0 0.0
      %762 = vmatprep.subr.mxu0 0.0
      %763 = vmatpush2.msra.mxu0 0.0
      %764 = vmatprep.subr.mxu0 0.0
      %765 = vmatpush2.msra.mxu0 0.0
      %766 = vmatprep.subr.mxu0 0.0
      %767 = vmatpush2.msra.mxu0 0.0
      %768 = vmatprep.subr.mxu0 0.0
      %769 = vmatpush2.msra.mxu0 0.0
      %770 = vmatprep.subr.mxu0 0.0
      %771 = vmatpush2.msra.mxu0 0.0
      %772 = vmatprep.subr.mxu0 0.0
      %773 = vmatpush2.msra.mxu0 0.0
      %774 = vmatprep.subr.mxu0 0.0
      %775 = vmatpush2.msra.mxu0 0.0
      %776 = vmatprep.subr.mxu0 0.0
      %777 = vmatpush2.msra.mxu0 0.0
      %778 = vmatprep.subr.mxu0 0.0
      %779 = vmatpush2.msra.mxu0 0.0
      %780 = vmatprep.subr.mxu0 0.0
      %781 = vmatpush2.msra.mxu0 0.0
      %782 = vmatprep.mubr.f32.mxu0 0.0
      %783 = vmatmul.mubr.f32.gmra.mxu0 %v698
      %v784 = vpop.f32.mrf.mxu0
      %v785 = vadd.f32 %v694, %v784
      %v786 = vpop.f32.mrf.mxu0
      %787 = vmatprep.mubr.f32.mxu0 0.0
      %788 = vmatmul.mubr.f32.gmra.mxu0 %v701
      %v789 = vpop.f32.mrf.mxu0
      %v790 = vadd.f32 %v694, %v789
      %v791 = vpop.f32.mrf.mxu0
      %792 = vmatprep.mubr.f32.mxu0 0.0
      %793 = vmatmul.mubr.f32.gmra.mxu0 %v704
      %v794 = vpop.f32.mrf.mxu0
      %v795 = vadd.f32 %v694, %v794
      %v796 = vpop.f32.mrf.mxu0
      %797 = vmatprep.mubr.f32.mxu0 0.0
      %798 = vmatmul.mubr.f32.gmra.mxu0 %v707
      %v799 = vpop.f32.mrf.mxu0
      %v800 = vadd.f32 %v694, %v799
      %v801 = vpop.f32.mrf.mxu0
      %802 = vmatprep.mubr.f32.mxu0 0.0
      %803 = vmatmul.mubr.f32.gmra.mxu0 %v710
      %v804 = vpop.f32.mrf.mxu0
      %v805 = vadd.f32 %v694, %v804
      %v806 = vpop.f32.mrf.mxu0
      %807 = vmatprep.mubr.f32.mxu0 0.0
      %808 = vmatmul.mubr.f32.gmra.mxu0 %v713
      %v809 = vpop.f32.mrf.mxu0
      %v810 = vadd.f32 %v694, %v809
      %v811 = vpop.f32.mrf.mxu0
      %812 = vdwg.mxu0
      %v813 = vmax.f32 %v785, 0.0
      %v814 = vmax.f32 %v790, 0.0
      %v815 = vmax.f32 %v795, 0.0
      %v816 = vmax.f32 %v800, 0.0
      %v817 = vmax.f32 %v805, 0.0
      %v818 = vmax.f32 %v810, 0.0
      %v823 = vrot.slane %v813, 3
      %v824 = vrot.slane %v814, 3
      %v825 = vsel %vm454, %v823, %v824
      %v826 = vrot.slane %v815, 3
      %v827 = vsel %vm454, %v824, %v826
      %v828 = vrot.slane %v816, 3
      %v829 = vsel %vm454, %v826, %v828
      %830 = vrot.lane.b32.xlu0 %v825, 32
      %v831 = vpop.permute.xlu0 %830
      %832 = vrot.lane.b32.xlu0 %v827, 32
      %v833 = vpop.permute.xlu0 %832
      %834 = vrot.lane.b32.xlu0 %v829, 32
      %v835 = vpop.permute.xlu0 %834
      %836 = vrot.lane.b32.xlu0 %v828, 32
      %v837 = vpop.permute.xlu0 %836
      %v843 = vrot.slane %v813, 6
      %v844 = vrot.slane %v814, 6
      %v845 = vsel %vm486, %v843, %v844
      %v846 = vrot.slane %v815, 6
      %v847 = vsel %vm486, %v844, %v846
      %v848 = vrot.slane %v816, 6
      %v849 = vsel %vm486, %v846, %v848
      %v850 = vrot.slane %v817, 6
      %v851 = vsel %vm486, %v848, %v850
      %852 = vrot.lane.b32.xlu0 %v845, 64
      %v853 = vpop.permute.xlu0 %852
      %854 = vrot.lane.b32.xlu0 %v847, 64
      %v855 = vpop.permute.xlu0 %854
      %856 = vrot.lane.b32.xlu0 %v849, 64
      %v857 = vpop.permute.xlu0 %856
      %858 = vrot.lane.b32.xlu0 %v851, 64
      %v859 = vpop.permute.xlu0 %858
      %v864 = vrot.slane %v814, 1
      %v865 = vrot.slane %v815, 1
      %v866 = vsel %vm518, %v864, %v865
      %v867 = vrot.slane %v816, 1
      %v868 = vsel %vm518, %v865, %v867
      %v869 = vrot.slane %v817, 1
      %v870 = vsel %vm518, %v867, %v869
      %871 = vrot.lane.b32.xlu0 %v866, 96
      %v872 = vpop.permute.xlu0 %871
      %873 = vrot.lane.b32.xlu0 %v868, 96
      %v874 = vpop.permute.xlu0 %873
      %875 = vrot.lane.b32.xlu0 %v870, 96
      %v876 = vpop.permute.xlu0 %875
      %877 = vrot.lane.b32.xlu0 %v869, 96
      %v878 = vpop.permute.xlu0 %877
      %v883 = vrot.slane %v814, 4
      %v884 = vrot.slane %v815, 4
      %v885 = vsel %vm549, %v883, %v884
      %v886 = vrot.slane %v816, 4
      %v887 = vsel %vm549, %v884, %v886
      %v888 = vrot.slane %v817, 4
      %v889 = vsel %vm549, %v886, %v888
      %v895 = vrot.slane %v814, 7
      %v896 = vrot.slane %v815, 7
      %v897 = vsel %vm581, %v895, %v896
      %v898 = vrot.slane %v816, 7
      %v899 = vsel %vm581, %v896, %v898
      %v900 = vrot.slane %v817, 7
      %v901 = vsel %vm581, %v898, %v900
      %v902 = vrot.slane %v818, 7
      %v903 = vsel %vm581, %v900, %v902
      %904 = vrot.lane.b32.xlu0 %v897, 32
      %v905 = vpop.permute.xlu0 %904
      %906 = vrot.lane.b32.xlu0 %v899, 32
      %v907 = vpop.permute.xlu0 %906
      %908 = vrot.lane.b32.xlu0 %v901, 32
      %v909 = vpop.permute.xlu0 %908
      %910 = vrot.lane.b32.xlu0 %v903, 32
      %v911 = vpop.permute.xlu0 %910
      %v916 = vrot.slane %v815, 2
      %v917 = vrot.slane %v816, 2
      %v918 = vsel %vm613, %v916, %v917
      %v919 = vrot.slane %v817, 2
      %v920 = vsel %vm613, %v917, %v919
      %v921 = vrot.slane %v818, 2
      %v922 = vsel %vm613, %v919, %v921
      %923 = vrot.lane.b32.xlu0 %v918, 64
      %v924 = vpop.permute.xlu0 %923
      %925 = vrot.lane.b32.xlu0 %v920, 64
      %v926 = vpop.permute.xlu0 %925
      %927 = vrot.lane.b32.xlu0 %v922, 64
      %v928 = vpop.permute.xlu0 %927
      %929 = vrot.lane.b32.xlu0 %v921, 64
      %v930 = vpop.permute.xlu0 %929
      %vm935 = vcmask 261120
      %v936 = vsel %vm935, %v813, %v831
      %v937 = vsel %vm935, %v814, %v833
      %v938 = vsel %vm935, %v815, %v835
      %v939 = vsel %vm935, %v816, %v837
      %vm940 = vcmask 523264
      %v941 = vsel %vm940, %v936, %v853
      %v942 = vsel %vm940, %v937, %v855
      %v943 = vsel %vm940, %v938, %v857
      %v944 = vsel %vm940, %v939, %v859
      %vm945 = vcmask 785408
      %v946 = vsel %vm945, %v941, %v872
      %v947 = vsel %vm945, %v942, %v874
      %v948 = vsel %vm945, %v943, %v876
      %v949 = vsel %vm945, %v944, %v878
      %v950 = vsel %vm935, %v885, %v905
      %v951 = vsel %vm935, %v887, %v907
      %v952 = vsel %vm935, %v889, %v909
      %v953 = vsel %vm935, %v888, %v911
      %v954 = vsel %vm940, %v950, %v924
      %v955 = vsel %vm940, %v951, %v926
      %v956 = vsel %vm940, %v952, %v928
      %v957 = vsel %vm940, %v953, %v930
      %v958 = vld [vmem:[%s3] sm:$0xff]
      %v959 = vld [vmem:[%s3 + $0x8] sm:$0xff]
      %v960 = vld [vmem:[%s3 + $0x10] sm:$0xff]
      %v961 = vld [vmem:[%s3 + $0x18] sm:$0xff]
      %v962 = vld [vmem:[%s3 + $0x20] sm:$0xff]
      %v963 = vld [vmem:[%s3 + $0x28] sm:$0xff]
      %v964 = vld [vmem:[%s3 + $0x30] sm:$0xff]
      %v965 = vld [vmem:[%s3 + $0x38] sm:$0xff]
      %v966 = vld [vmem:[%s3 + $0x40] sm:$0xff]
      %v967 = vld [vmem:[%s3 + $0x48] sm:$0xff]
      %v968 = vld [vmem:[%s3 + $0x50] sm:$0xff]
      %v969 = vld [vmem:[%s3 + $0x58] sm:$0xff]
      %v970 = vld [vmem:[%s3 + $0x60] sm:$0xff]
      %v971 = vld [vmem:[%s3 + $0x68] sm:$0xff]
      %v972 = vld [vmem:[%s3 + $0x70] sm:$0xff]
      %v973 = vld [vmem:[%s3 + $0x78] sm:$0xff]
      %v974 = vld [vmem:[%s3 + $0x80] sm:$0xff]
      %v975 = vld [vmem:[%s3 + $0x88] sm:$0xff]
      %v976 = vld [vmem:[%s3 + $0x90] sm:$0xff]
      %v977 = vld [vmem:[%s3 + $0x98] sm:$0xff]
      %v978 = vld [vmem:[%s3 + $0xa0] sm:$0xff]
      %v979 = vld [vmem:[%s3 + $0xa8] sm:$0xff]
      %v980 = vld [vmem:[%s3 + $0xb0] sm:$0xff]
      %v981 = vld [vmem:[%s3 + $0xb8] sm:$0xff]
      %v982 = vld [vmem:[%s3 + $0xc0] sm:$0xff]
      %v983 = vld [vmem:[%s3 + $0xc8] sm:$0xff]
      %v984 = vld [vmem:[%s3 + $0xd0] sm:$0xff]
      %v985 = vld [vmem:[%s3 + $0xd8] sm:$0xff]
      %v986 = vld [vmem:[%s4] sm:$0x1]
      %v988 = vlaneseq
      %v989 = vshrl.u32 %v988, 7
      %v990 = vsub.s32 0, %v989
      %v991 = vrot.slane %v986, %v990
      %v994 = vsel %vm945, %v954, 0
      %v997 = vsel %vm945, %v955, 0
      %v1000 = vsel %vm945, %v956, 0
      %v1003 = vsel %vm945, %v957, 0
      %1005 = vmatprep.subr.mxu0 0.0
      %1006 = vmatpush1.msra.mxu0 %v973
      %1007 = vmatprep.subr.mxu0 0.0
      %1008 = vmatpush1.msra.mxu0 %v972
      %1009 = vmatprep.subr.mxu0 0.0
      %1010 = vmatpush1.msra.mxu0 %v971
      %1011 = vmatprep.subr.mxu0 0.0
      %1012 = vmatpush1.msra.mxu0 %v970
      %1013 = vmatprep.subr.mxu0 0.0
      %1014 = vmatpush1.msra.mxu0 %v969
      %1015 = vmatprep.subr.mxu0 0.0
      %1016 = vmatpush1.msra.mxu0 %v968
      %1017 = vmatprep.subr.mxu0 0.0
      %1018 = vmatpush1.msra.mxu0 %v967
      %1019 = vmatprep.subr.mxu0 0.0
      %1020 = vmatpush1.msra.mxu0 %v966
      %1021 = vmatprep.subr.mxu0 0.0
      %1022 = vmatpush1.msra.mxu0 %v965
      %1023 = vmatprep.subr.mxu0 0.0
      %1024 = vmatpush1.msra.mxu0 %v964
      %1025 = vmatprep.subr.mxu0 0.0
      %1026 = vmatpush1.msra.mxu0 %v963
      %1027 = vmatprep.subr.mxu0 0.0
      %1028 = vmatpush1.msra.mxu0 %v962
      %1029 = vmatprep.subr.mxu0 0.0
      %1030 = vmatpush1.msra.mxu0 %v961
      %1031 = vmatprep.subr.mxu0 0.0
      %1032 = vmatpush1.msra.mxu0 %v960
      %1033 = vmatprep.subr.mxu0 0.0
      %1034 = vmatpush1.msra.mxu0 %v959
      %1035 = vmatprep.subr.mxu0 0.0
      %1036 = vmatpush1.msra.mxu0 %v958
      %1037 = vmatprep.subr.mxu0 0.0
      %1038 = vmatpush2.msra.mxu0 0.0
      %1039 = vmatprep.subr.mxu0 0.0
      %1040 = vmatpush2.msra.mxu0 0.0
      %1041 = vmatprep.subr.mxu0 0.0
      %1042 = vmatpush2.msra.mxu0 0.0
      %1043 = vmatprep.subr.mxu0 0.0
      %1044 = vmatpush2.msra.mxu0 0.0
      %1045 = vmatprep.subr.mxu0 0.0
      %1046 = vmatpush2.msra.mxu0 %v985
      %1047 = vmatprep.subr.mxu0 0.0
      %1048 = vmatpush2.msra.mxu0 %v984
      %1049 = vmatprep.subr.mxu0 0.0
      %1050 = vmatpush2.msra.mxu0 %v983
      %1051 = vmatprep.subr.mxu0 0.0
      %1052 = vmatpush2.msra.mxu0 %v982
      %1053 = vmatprep.subr.mxu0 0.0
      %1054 = vmatpush2.msra.mxu0 %v981
      %1055 = vmatprep.subr.mxu0 0.0
      %1056 = vmatpush2.msra.mxu0 %v980
      %1057 = vmatprep.subr.mxu0 0.0
      %1058 = vmatpush2.msra.mxu0 %v979
      %1059 = vmatprep.subr.mxu0 0.0
      %1060 = vmatpush2.msra.mxu0 %v978
      %1061 = vmatprep.subr.mxu0 0.0
      %1062 = vmatpush2.msra.mxu0 %v977
      %1063 = vmatprep.subr.mxu0 0.0
      %1064 = vmatpush2.msra.mxu0 %v976
      %1065 = vmatprep.subr.mxu0 0.0
      %1066 = vmatpush2.msra.mxu0 %v975
      %1067 = vmatprep.subr.mxu0 0.0
      %1068 = vmatpush2.msra.mxu0 %v974
      %1069 = vmatprep.mubr.f32.mxu0 %v994
      %1070 = vmatmul.mubr.f32.gmra.mxu0 %v946
      %v1071 = vpop.f32.mrf.mxu0
      %v1072 = vadd.f32 %v991, %v1071
      %v1073 = vpop.f32.mrf.mxu0
      %1074 = vmatprep.mubr.f32.mxu0 %v997
      %1075 = vmatmul.mubr.f32.gmra.mxu0 %v947
      %v1076 = vpop.f32.mrf.mxu0
      %v1077 = vadd.f32 %v991, %v1076
      %v1078 = vpop.f32.mrf.mxu0
      %1079 = vmatprep.mubr.f32.mxu0 %v1000
      %1080 = vmatmul.mubr.f32.gmra.mxu0 %v948
      %v1081 = vpop.f32.mrf.mxu0
      %v1082 = vadd.f32 %v991, %v1081
      %v1083 = vpop.f32.mrf.mxu0
      %1084 = vmatprep.mubr.f32.mxu0 %v1003
      %1085 = vmatmul.mubr.f32.gmra.mxu0 %v949
      %v1086 = vpop.f32.mrf.mxu0
      %v1087 = vadd.f32 %v991, %v1086
      %v1088 = vpop.f32.mrf.mxu0
      %1089 = vdwg.mxu0
      %v1090 = vmax.f32 %v1072, 0.0
      %v1091 = vmax.f32 %v1077, 0.0
      %v1092 = vmax.f32 %v1082, 0.0
      %v1093 = vmax.f32 %v1087, 0.0
      %v1098 = vrot.slane %v1090, 7
      %v1099 = vrot.slane %v1091, 7
      %v1100 = vsel %vm581, %v1098, %v1099
      %v1101 = vrot.slane %v1092, 7
      %v1102 = vsel %vm581, %v1099, %v1101
      %v1103 = vrot.slane %v1093, 7
      %v1104 = vsel %vm581, %v1101, %v1103
      %v1109 = vsel %vm581, 0.0, %v1098
      %v1110 = vsel %vm454, %v1104, 0.0
      %v1113 = vrot.slane %v1109, 1
      %v1114 = vrot.slane %v1100, 1
      %v1115 = vsel %vm518, %v1113, %v1114
      %v1116 = vrot.slane %v1102, 1
      %v1117 = vsel %vm518, %v1114, %v1116
      %v1118 = vrot.slane %v1110, 1
      %v1119 = vsel %vm518, %v1116, %v1118
      %1120 = vrot.lane.b32.xlu0 %v1115, 64
      %v1121 = vpop.permute.xlu0 %1120
      %1122 = vrot.lane.b32.xlu0 %v1117, 64
      %v1123 = vpop.permute.xlu0 %1122
      %1124 = vrot.lane.b32.xlu0 %v1119, 64
      %v1125 = vpop.permute.xlu0 %1124
      %1126 = vrot.lane.b32.xlu0 %v1118, 64
      %v1127 = vpop.permute.xlu0 %1126
      %v1132 = vrot.slane %v1109, 2
      %v1133 = vrot.slane %v1100, 2
      %v1134 = vsel %vm613, %v1132, %v1133
      %v1135 = vrot.slane %v1102, 2
      %v1136 = vsel %vm613, %v1133, %v1135
      %v1137 = vrot.slane %v1110, 2
      %v1138 = vsel %vm613, %v1135, %v1137
      %v1139 = vsel %vm940, %v1109, %v1121
      %v1140 = vsel %vm940, %v1100, %v1123
      %v1141 = vsel %vm940, %v1102, %v1125
      %v1142 = vsel %vm940, %v1110, %v1127
      %v1143 = vld [vmem:[%s5] sm:$0xff]
      %v1144 = vld [vmem:[%s5 + $0x8] sm:$0xff]
      %v1145 = vld [vmem:[%s5 + $0x10] sm:$0xff]
      %v1146 = vld [vmem:[%s5 + $0x18] sm:$0xff]
      %v1147 = vld [vmem:[%s5 + $0x20] sm:$0xff]
      %v1148 = vld [vmem:[%s5 + $0x28] sm:$0xff]
      %v1149 = vld [vmem:[%s5 + $0x30] sm:$0xff]
      %v1150 = vld [vmem:[%s5 + $0x38] sm:$0xff]
      %v1151 = vld [vmem:[%s5 + $0x40] sm:$0xff]
      %v1152 = vld [vmem:[%s5 + $0x48] sm:$0xff]
      %v1153 = vld [vmem:[%s5 + $0x50] sm:$0xff]
      %v1154 = vld [vmem:[%s5 + $0x58] sm:$0xff]
      %v1155 = vld [vmem:[%s5 + $0x60] sm:$0xff]
      %v1156 = vld [vmem:[%s5 + $0x68] sm:$0xff]
      %v1157 = vld [vmem:[%s5 + $0x70] sm:$0xff]
      %v1158 = vld [vmem:[%s5 + $0x78] sm:$0xff]
      %v1159 = vld [vmem:[%s5 + $0x80] sm:$0xff]
      %v1160 = vld [vmem:[%s5 + $0x88] sm:$0xff]
      %v1161 = vld [vmem:[%s5 + $0x90] sm:$0xff]
      %v1162 = vld [vmem:[%s5 + $0x98] sm:$0xff]
      %v1163 = vld [vmem:[%s5 + $0xa0] sm:$0xff]
      %v1164 = vld [vmem:[%s5 + $0xa8] sm:$0xff]
      %v1165 = vld [vmem:[%s5 + $0xb0] sm:$0xff]
      %v1166 = vld [vmem:[%s5 + $0xb8] sm:$0xff]
      %v1167 = vld [vmem:[%s6] sm:$0x1]
      %v1169 = vlaneseq
      %v1170 = vshrl.u32 %v1169, 7
      %v1171 = vsub.s32 0, %v1170
      %v1172 = vrot.slane %v1167, %v1171
      %v1174 = vsel %vm940, %v1134, 0
      %v1176 = vsel %vm940, %v1136, 0
      %v1178 = vsel %vm940, %v1138, 0
      %v1180 = vsel %vm940, %v1137, 0
      %1182 = vmatprep.subr.mxu0 0.0
      %1183 = vmatpush1.msra.mxu0 %v1158
      %1184 = vmatprep.subr.mxu0 0.0
      %1185 = vmatpush1.msra.mxu0 %v1157
      %1186 = vmatprep.subr.mxu0 0.0
      %1187 = vmatpush1.msra.mxu0 %v1156
      %1188 = vmatprep.subr.mxu0 0.0
      %1189 = vmatpush1.msra.mxu0 %v1155
      %1190 = vmatprep.subr.mxu0 0.0
      %1191 = vmatpush1.msra.mxu0 %v1154
      %1192 = vmatprep.subr.mxu0 0.0
      %1193 = vmatpush1.msra.mxu0 %v1153
      %1194 = vmatprep.subr.mxu0 0.0
      %1195 = vmatpush1.msra.mxu0 %v1152
      %1196 = vmatprep.subr.mxu0 0.0
      %1197 = vmatpush1.msra.mxu0 %v1151
      %1198 = vmatprep.subr.mxu0 0.0
      %1199 = vmatpush1.msra.mxu0 %v1150
      %1200 = vmatprep.subr.mxu0 0.0
      %1201 = vmatpush1.msra.mxu0 %v1149
      %1202 = vmatprep.subr.mxu0 0.0
      %1203 = vmatpush1.msra.mxu0 %v1148
      %1204 = vmatprep.subr.mxu0 0.0
      %1205 = vmatpush1.msra.mxu0 %v1147
      %1206 = vmatprep.subr.mxu0 0.0
      %1207 = vmatpush1.msra.mxu0 %v1146
      %1208 = vmatprep.subr.mxu0 0.0
      %1209 = vmatpush1.msra.mxu0 %v1145
      %1210 = vmatprep.subr.mxu0 0.0
      %1211 = vmatpush1.msra.mxu0 %v1144
      %1212 = vmatprep.subr.mxu0 0.0
      %1213 = vmatpush1.msra.mxu0 %v1143
      %1214 = vmatprep.subr.mxu0 0.0
      %1215 = vmatpush2.msra.mxu0 0.0
      %1216 = vmatprep.subr.mxu0 0.0
      %1217 = vmatpush2.msra.mxu0 0.0
      %1218 = vmatprep.subr.mxu0 0.0
      %1219 = vmatpush2.msra.mxu0 0.0
      %1220 = vmatprep.subr.mxu0 0.0
      %1221 = vmatpush2.msra.mxu0 0.0
      %1222 = vmatprep.subr.mxu0 0.0
      %1223 = vmatpush2.msra.mxu0 0.0
      %1224 = vmatprep.subr.mxu0 0.0
      %1225 = vmatpush2.msra.mxu0 0.0
      %1226 = vmatprep.subr.mxu0 0.0
      %1227 = vmatpush2.msra.mxu0 0.0
      %1228 = vmatprep.subr.mxu0 0.0
      %1229 = vmatpush2.msra.mxu0 0.0
      %1230 = vmatprep.subr.mxu0 0.0
      %1231 = vmatpush2.msra.mxu0 %v1166
      %1232 = vmatprep.subr.mxu0 0.0
      %1233 = vmatpush2.msra.mxu0 %v1165
      %1234 = vmatprep.subr.mxu0 0.0
      %1235 = vmatpush2.msra.mxu0 %v1164
      %1236 = vmatprep.subr.mxu0 0.0
      %1237 = vmatpush2.msra.mxu0 %v1163
      %1238 = vmatprep.subr.mxu0 0.0
      %1239 = vmatpush2.msra.mxu0 %v1162
      %1240 = vmatprep.subr.mxu0 0.0
      %1241 = vmatpush2.msra.mxu0 %v1161
      %1242 = vmatprep.subr.mxu0 0.0
      %1243 = vmatpush2.msra.mxu0 %v1160
      %1244 = vmatprep.subr.mxu0 0.0
      %1245 = vmatpush2.msra.mxu0 %v1159
      %1246 = vmatprep.mubr.f32.mxu0 %v1174
      %1247 = vmatmul.mubr.f32.gmra.mxu0 %v1139
      %v1248 = vpop.f32.mrf.mxu0
      %v1249 = vadd.f32 %v1172, %v1248
      %v1250 = vpop.f32.mrf.mxu0
      %1251 = vmatprep.mubr.f32.mxu0 %v1176
      %1252 = vmatmul.mubr.f32.gmra.mxu0 %v1140
      %v1253 = vpop.f32.mrf.mxu0
      %v1254 = vadd.f32 %v1172, %v1253
      %v1255 = vpop.f32.mrf.mxu0
      %1256 = vmatprep.mubr.f32.mxu0 %v1178
      %1257 = vmatmul.mubr.f32.gmra.mxu0 %v1141
      %v1258 = vpop.f32.mrf.mxu0
      %v1259 = vadd.f32 %v1172, %v1258
      %v1260 = vpop.f32.mrf.mxu0
      %1261 = vmatprep.mubr.f32.mxu0 %v1180
      %1262 = vmatmul.mubr.f32.gmra.mxu0 %v1142
      %v1263 = vpop.f32.mrf.mxu0
      %v1264 = vadd.f32 %v1172, %v1263
      %v1265 = vpop.f32.mrf.mxu0
      %1266 = vdwg.mxu0
      %v1267 = vmax.f32 %v1249, 0.0
      %v1268 = vmax.f32 %v1254, 0.0
      %v1269 = vmax.f32 %v1259, 0.0
      %v1270 = vmax.f32 %v1264, 0.0
      %v1275 = vrot.slane %v1267, 7
      %v1276 = vrot.slane %v1268, 7
      %v1277 = vsel %vm581, %v1275, %v1276
      %v1278 = vrot.slane %v1269, 7
      %v1279 = vsel %vm581, %v1276, %v1278
      %v1280 = vrot.slane %v1270, 7
      %v1281 = vsel %vm581, %v1278, %v1280
      %v1286 = vsel %vm581, 0.0, %v1275
      %v1287 = vsel %vm454, %v1281, 0.0
      %v1290 = vrot.slane %v1286, 1
      %v1291 = vrot.slane %v1277, 1
      %v1292 = vsel %vm518, %v1290, %v1291
      %v1293 = vrot.slane %v1279, 1
      %v1294 = vsel %vm518, %v1291, %v1293
      %v1295 = vrot.slane %v1287, 1
      %v1296 = vsel %vm518, %v1293, %v1295
      %1297 = vrot.lane.b32.xlu0 %v1292, 64
      %v1298 = vpop.permute.xlu0 %1297
      %1299 = vrot.lane.b32.xlu0 %v1294, 64
      %v1300 = vpop.permute.xlu0 %1299
      %1301 = vrot.lane.b32.xlu0 %v1296, 64
      %v1302 = vpop.permute.xlu0 %1301
      %1303 = vrot.lane.b32.xlu0 %v1295, 64
      %v1304 = vpop.permute.xlu0 %1303
      %v1309 = vrot.slane %v1286, 2
      %v1310 = vrot.slane %v1277, 2
      %v1311 = vsel %vm613, %v1309, %v1310
      %v1312 = vrot.slane %v1279, 2
      %v1313 = vsel %vm613, %v1310, %v1312
      %v1314 = vrot.slane %v1287, 2
      %v1315 = vsel %vm613, %v1312, %v1314
      %v1316 = vsel %vm940, %v1286, %v1298
      %v1317 = vsel %vm940, %v1277, %v1300
      %v1318 = vsel %vm940, %v1279, %v1302
      %v1319 = vsel %vm940, %v1287, %v1304
      %v1320 = vld [vmem:[%s7] sm:$0xff]
      %v1321 = vld [vmem:[%s7 + $0x8] sm:$0xff]
      %v1322 = vld [vmem:[%s7 + $0x10] sm:$0xff]
      %v1323 = vld [vmem:[%s7 + $0x18] sm:$0xff]
      %v1324 = vld [vmem:[%s7 + $0x20] sm:$0xff]
      %v1325 = vld [vmem:[%s7 + $0x28] sm:$0xff]
      %v1326 = vld [vmem:[%s7 + $0x30] sm:$0xff]
      %v1327 = vld [vmem:[%s7 + $0x38] sm:$0xff]
      %v1328 = vld [vmem:[%s7 + $0x40] sm:$0xff]
      %v1329 = vld [vmem:[%s7 + $0x48] sm:$0xff]
      %v1330 = vld [vmem:[%s7 + $0x50] sm:$0xff]
      %v1331 = vld [vmem:[%s7 + $0x58] sm:$0xff]
      %v1332 = vld [vmem:[%s7 + $0x60] sm:$0xff]
      %v1333 = vld [vmem:[%s7 + $0x68] sm:$0xff]
      %v1334 = vld [vmem:[%s7 + $0x70] sm:$0xff]
      %v1335 = vld [vmem:[%s7 + $0x78] sm:$0xff]
      %v1336 = vld [vmem:[%s7 + $0x80] sm:$0xff]
      %v1337 = vld [vmem:[%s7 + $0x88] sm:$0xff]
      %v1338 = vld [vmem:[%s7 + $0x90] sm:$0xff]
      %v1339 = vld [vmem:[%s7 + $0x98] sm:$0xff]
      %v1340 = vld [vmem:[%s7 + $0xa0] sm:$0xff]
      %v1341 = vld [vmem:[%s7 + $0xa8] sm:$0xff]
      %v1342 = vld [vmem:[%s7 + $0xb0] sm:$0xff]
      %v1343 = vld [vmem:[%s7 + $0xb8] sm:$0xff]
      %v1344 = vld [vmem:[%s8] sm:$0x1]
      %v1346 = vlaneseq
      %v1347 = vshrl.u32 %v1346, 7
      %v1348 = vsub.s32 0, %v1347
      %v1349 = vrot.slane %v1344, %v1348
      %v1351 = vsel %vm940, %v1311, 0
      %v1353 = vsel %vm940, %v1313, 0
      %v1355 = vsel %vm940, %v1315, 0
      %v1357 = vsel %vm940, %v1314, 0
      %1359 = vmatprep.subr.mxu0 0.0
      %1360 = vmatpush1.msra.mxu0 %v1335
      %1361 = vmatprep.subr.mxu0 0.0
      %1362 = vmatpush1.msra.mxu0 %v1334
      %1363 = vmatprep.subr.mxu0 0.0
      %1364 = vmatpush1.msra.mxu0 %v1333
      %1365 = vmatprep.subr.mxu0 0.0
      %1366 = vmatpush1.msra.mxu0 %v1332
      %1367 = vmatprep.subr.mxu0 0.0
      %1368 = vmatpush1.msra.mxu0 %v1331
      %1369 = vmatprep.subr.mxu0 0.0
      %1370 = vmatpush1.msra.mxu0 %v1330
      %1371 = vmatprep.subr.mxu0 0.0
      %1372 = vmatpush1.msra.mxu0 %v1329
      %1373 = vmatprep.subr.mxu0 0.0
      %1374 = vmatpush1.msra.mxu0 %v1328
      %1375 = vmatprep.subr.mxu0 0.0
      %1376 = vmatpush1.msra.mxu0 %v1327
      %1377 = vmatprep.subr.mxu0 0.0
      %1378 = vmatpush1.msra.mxu0 %v1326
      %1379 = vmatprep.subr.mxu0 0.0
      %1380 = vmatpush1.msra.mxu0 %v1325
      %1381 = vmatprep.subr.mxu0 0.0
      %1382 = vmatpush1.msra.mxu0 %v1324
      %1383 = vmatprep.subr.mxu0 0.0
      %1384 = vmatpush1.msra.mxu0 %v1323
      %1385 = vmatprep.subr.mxu0 0.0
      %1386 = vmatpush1.msra.mxu0 %v1322
      %1387 = vmatprep.subr.mxu0 0.0
      %1388 = vmatpush1.msra.mxu0 %v1321
      %1389 = vmatprep.subr.mxu0 0.0
      %1390 = vmatpush1.msra.mxu0 %v1320
      %1391 = vmatprep.subr.mxu0 0.0
      %1392 = vmatpush2.msra.mxu0 0.0
      %1393 = vmatprep.subr.mxu0 0.0
      %1394 = vmatpush2.msra.mxu0 0.0
      %1395 = vmatprep.subr.mxu0 0.0
      %1396 = vmatpush2.msra.mxu0 0.0
      %1397 = vmatprep.subr.mxu0 0.0
      %1398 = vmatpush2.msra.mxu0 0.0
      %1399 = vmatprep.subr.mxu0 0.0
      %1400 = vmatpush2.msra.mxu0 0.0
      %1401 = vmatprep.subr.mxu0 0.0
      %1402 = vmatpush2.msra.mxu0 0.0
      %1403 = vmatprep.subr.mxu0 0.0
      %1404 = vmatpush2.msra.mxu0 0.0
      %1405 = vmatprep.subr.mxu0 0.0
      %1406 = vmatpush2.msra.mxu0 0.0
      %1407 = vmatprep.subr.mxu0 0.0
      %1408 = vmatpush2.msra.mxu0 %v1343
      %1409 = vmatprep.subr.mxu0 0.0
      %1410 = vmatpush2.msra.mxu0 %v1342
      %1411 = vmatprep.subr.mxu0 0.0
      %1412 = vmatpush2.msra.mxu0 %v1341
      %1413 = vmatprep.subr.mxu0 0.0
      %1414 = vmatpush2.msra.mxu0 %v1340
      %1415 = vmatprep.subr.mxu0 0.0
      %1416 = vmatpush2.msra.mxu0 %v1339
      %1417 = vmatprep.subr.mxu0 0.0
      %1418 = vmatpush2.msra.mxu0 %v1338
      %1419 = vmatprep.subr.mxu0 0.0
      %1420 = vmatpush2.msra.mxu0 %v1337
      %1421 = vmatprep.subr.mxu0 0.0
      %1422 = vmatpush2.msra.mxu0 %v1336
      %1423 = vmatprep.mubr.f32.mxu0 %v1351
      %1424 = vmatmul.mubr.f32.gmra.mxu0 %v1316
      %v1425 = vpop.f32.mrf.mxu0
      %v1426 = vadd.f32 %v1349, %v1425
      %v1427 = vpop.f32.mrf.mxu0
      %1428 = vmatprep.mubr.f32.mxu0 %v1353
      %1429 = vmatmul.mubr.f32.gmra.mxu0 %v1317
      %v1430 = vpop.f32.mrf.mxu0
      %v1431 = vadd.f32 %v1349, %v1430
      %v1432 = vpop.f32.mrf.mxu0
      %1433 = vmatprep.mubr.f32.mxu0 %v1355
      %1434 = vmatmul.mubr.f32.gmra.mxu0 %v1318
      %v1435 = vpop.f32.mrf.mxu0
      %v1436 = vadd.f32 %v1349, %v1435
      %v1437 = vpop.f32.mrf.mxu0
      %1438 = vmatprep.mubr.f32.mxu0 %v1357
      %1439 = vmatmul.mubr.f32.gmra.mxu0 %v1319
      %v1440 = vpop.f32.mrf.mxu0
      %v1441 = vadd.f32 %v1349, %v1440
      %v1442 = vpop.f32.mrf.mxu0
      %1443 = vdwg.mxu0
      %v1444 = vadd.f32 %v1426, %v1090
      %v1445 = vadd.f32 %v1431, %v1091
      %v1446 = vadd.f32 %v1436, %v1092
      %v1447 = vadd.f32 %v1441, %v1093
      %v1448 = vmax.f32 %v1444, 0.0
      %v1449 = vmax.f32 %v1445, 0.0
      %v1450 = vmax.f32 %v1446, 0.0
      %v1451 = vmax.f32 %v1447, 0.0
      %v1453 = vrot.slane %v1448, 1
      %1454 = vrot.lane.b32.xlu0 %v1453, 64
      %v1455 = vpop.permute.xlu0 %1454
      %v1457 = vrot.slane %v1448, 2
      %v1459 = vrot.slane %v1448, 3
      %1460 = vrot.lane.b32.xlu0 %v1459, 64
      %v1461 = vpop.permute.xlu0 %1460
      %v1463 = vrot.slane %v1448, 4
      %v1465 = vrot.slane %v1448, 5
      %1466 = vrot.lane.b32.xlu0 %v1465, 64
      %v1467 = vpop.permute.xlu0 %1466
      %v1469 = vrot.slane %v1448, 6
      %v1471 = vrot.slane %v1448, 7
      %1472 = vrot.lane.b32.xlu0 %v1471, 64
      %v1473 = vpop.permute.xlu0 %1472
      %v1476 = vrot.slane %v1449, 1
      %1477 = vrot.lane.b32.xlu0 %v1476, 64
      %v1478 = vpop.permute.xlu0 %1477
      %v1480 = vrot.slane %v1449, 2
      %v1482 = vrot.slane %v1449, 3
      %1483 = vrot.lane.b32.xlu0 %v1482, 64
      %v1484 = vpop.permute.xlu0 %1483
      %v1486 = vrot.slane %v1449, 4
      %v1488 = vrot.slane %v1449, 5
      %1489 = vrot.lane.b32.xlu0 %v1488, 64
      %v1490 = vpop.permute.xlu0 %1489
      %v1492 = vrot.slane %v1449, 6
      %v1494 = vrot.slane %v1449, 7
      %1495 = vrot.lane.b32.xlu0 %v1494, 64
      %v1496 = vpop.permute.xlu0 %1495
      %v1498 = vsel %vm940, %v1448, %v1455
      %v1499 = vsel %vm940, %v1457, %v1461
      %v1500 = vsel %vm940, %v1463, %v1467
      %v1501 = vsel %vm940, %v1469, %v1473
      %v1502 = vsel %vm940, %v1449, %v1478
      %v1503 = vsel %vm940, %v1480, %v1484
      %v1504 = vsel %vm940, %v1486, %v1490
      %v1505 = vsel %vm940, %v1492, %v1496
      %v1507 = vrot.slane %v1450, 1
      %1508 = vrot.lane.b32.xlu0 %v1507, 64
      %v1509 = vpop.permute.xlu0 %1508
      %v1511 = vrot.slane %v1450, 2
      %v1513 = vrot.slane %v1450, 3
      %1514 = vrot.lane.b32.xlu0 %v1513, 64
      %v1515 = vpop.permute.xlu0 %1514
      %v1517 = vrot.slane %v1450, 4
      %v1519 = vrot.slane %v1450, 5
      %1520 = vrot.lane.b32.xlu0 %v1519, 64
      %v1521 = vpop.permute.xlu0 %1520
      %v1523 = vrot.slane %v1450, 6
      %v1525 = vrot.slane %v1450, 7
      %1526 = vrot.lane.b32.xlu0 %v1525, 64
      %v1527 = vpop.permute.xlu0 %1526
      %v1530 = vrot.slane %v1451, 1
      %1531 = vrot.lane.b32.xlu0 %v1530, 64
      %v1532 = vpop.permute.xlu0 %1531
      %v1534 = vrot.slane %v1451, 2
      %v1536 = vrot.slane %v1451, 3
      %1537 = vrot.lane.b32.xlu0 %v1536, 64
      %v1538 = vpop.permute.xlu0 %1537
      %v1540 = vsel %vm940, %v1450, %v1509
      %v1541 = vsel %vm940, %v1511, %v1515
      %v1542 = vsel %vm940, %v1517, %v1521
      %v1543 = vsel %vm940, %v1523, %v1527
      %v1544 = vsel %vm940, %v1451, %v1532
      %v1545 = vsel %vm940, %v1534, %v1538
      %v1546 = vld [vmem:[%s9] sm:$0xff]
      %v1547 = vld [vmem:[%s9 + $0x8] sm:$0xff]
      %v1548 = vld [vmem:[%s9 + $0x10] sm:$0xff]
      %v1549 = vld [vmem:[%s9 + $0x18] sm:$0xff]
      %v1550 = vld [vmem:[%s9 + $0x20] sm:$0xff]
      %v1551 = vld [vmem:[%s9 + $0x28] sm:$0xff]
      %v1552 = vld [vmem:[%s9 + $0x30] sm:$0xff]
      %v1553 = vld [vmem:[%s9 + $0x38] sm:$0xff]
      %v1554 = vld [vmem:[%s9 + $0x40] sm:$0xff]
      %v1555 = vld [vmem:[%s9 + $0x48] sm:$0xff]
      %v1556 = vld [vmem:[%s9 + $0x50] sm:$0xff]
      %v1557 = vld [vmem:[%s9 + $0x58] sm:$0xff]
      %v1558 = vld [vmem:[%s9 + $0x60] sm:$0xff]
      %v1559 = vld [vmem:[%s9 + $0x68] sm:$0xff]
      %v1560 = vld [vmem:[%s9 + $0x70] sm:$0xff]
      %v1561 = vld [vmem:[%s9 + $0x78] sm:$0xff]
      %v1562 = vld [vmem:[%s9 + $0x80] sm:$0xff]
      %v1563 = vld [vmem:[%s9 + $0x88] sm:$0xff]
      %v1564 = vld [vmem:[%s9 + $0x90] sm:$0xff]
      %v1565 = vld [vmem:[%s9 + $0x98] sm:$0xff]
      %v1566 = vld [vmem:[%s9 + $0xa0] sm:$0xff]
      %v1567 = vld [vmem:[%s9 + $0xa8] sm:$0xff]
      %v1568 = vld [vmem:[%s9 + $0xb0] sm:$0xff]
      %v1569 = vld [vmem:[%s9 + $0xb8] sm:$0xff]
      %v1570 = vld [vmem:[%s9 + $0xc0] sm:$0xff]
      %v1571 = vld [vmem:[%s9 + $0xc8] sm:$0xff]
      %v1572 = vld [vmem:[%s9 + $0xd0] sm:$0xff]
      %v1573 = vld [vmem:[%s9 + $0xd8] sm:$0xff]
      %v1574 = vld [vmem:[%s9 + $0xe0] sm:$0xff]
      %v1575 = vld [vmem:[%s9 + $0xe8] sm:$0xff]
      %v1576 = vld [vmem:[%s9 + $0xf0] sm:$0xff]
      %v1577 = vld [vmem:[%s9 + $0xf8] sm:$0xff]
      %v1578 = vld [vmem:[%s9 + $0x100] sm:$0xff]
      %v1579 = vld [vmem:[%s9 + $0x108] sm:$0xff]
      %v1580 = vld [vmem:[%s9 + $0x110] sm:$0xff]
      %v1581 = vld [vmem:[%s9 + $0x118] sm:$0xff]
      %v1582 = vld [vmem:[%s9 + $0x120] sm:$0xff]
      %v1583 = vld [vmem:[%s9 + $0x128] sm:$0xff]
      %v1584 = vld [vmem:[%s9 + $0x130] sm:$0xff]
      %v1585 = vld [vmem:[%s9 + $0x138] sm:$0xff]
      %v1586 = vld [vmem:[%s9 + $0x140] sm:$0xff]
      %v1587 = vld [vmem:[%s9 + $0x148] sm:$0xff]
      %v1588 = vld [vmem:[%s9 + $0x150] sm:$0xff]
      %v1589 = vld [vmem:[%s9 + $0x158] sm:$0xff]
      %v1590 = vld [vmem:[%s9 + $0x160] sm:$0xff]
      %v1591 = vld [vmem:[%s9 + $0x168] sm:$0xff]
      %v1592 = vld [vmem:[%s9 + $0x170] sm:$0xff]
      %v1593 = vld [vmem:[%s9 + $0x178] sm:$0xff]
      %v1594 = vld [vmem:[%s9 + $0x180] sm:$0xff]
      %v1595 = vld [vmem:[%s9 + $0x188] sm:$0xff]
      %v1596 = vld [vmem:[%s9 + $0x190] sm:$0xff]
      %v1597 = vld [vmem:[%s9 + $0x198] sm:$0xff]
      %v1598 = vld [vmem:[%s9 + $0x1a0] sm:$0xff]
      %v1599 = vld [vmem:[%s9 + $0x1a8] sm:$0xff]
      %v1600 = vld [vmem:[%s9 + $0x1b0] sm:$0xff]
      %v1601 = vld [vmem:[%s9 + $0x1b8] sm:$0xff]
      %v1602 = vld [vmem:[%s9 + $0x1c0] sm:$0xff]
      %v1603 = vld [vmem:[%s9 + $0x1c8] sm:$0xff]
      %v1604 = vld [vmem:[%s9 + $0x1d0] sm:$0xff]
      %v1605 = vld [vmem:[%s9 + $0x1d8] sm:$0xff]
      %v1606 = vld [vmem:[%s9 + $0x1e0] sm:$0xff]
      %v1607 = vld [vmem:[%s9 + $0x1e8] sm:$0xff]
      %v1608 = vld [vmem:[%s9 + $0x1f0] sm:$0xff]
      %v1609 = vld [vmem:[%s9 + $0x1f8] sm:$0xff]
      %v1610 = vld [vmem:[%s9 + $0x200] sm:$0xff]
      %v1611 = vld [vmem:[%s9 + $0x208] sm:$0xff]
      %v1612 = vld [vmem:[%s9 + $0x210] sm:$0xff]
      %v1613 = vld [vmem:[%s9 + $0x218] sm:$0xff]
      %v1614 = vld [vmem:[%s9 + $0x220] sm:$0xff]
      %v1615 = vld [vmem:[%s9 + $0x228] sm:$0xff]
      %v1616 = vld [vmem:[%s9 + $0x230] sm:$0xff]
      %v1617 = vld [vmem:[%s9 + $0x238] sm:$0xff]
      %v1618 = vld [vmem:[%s9 + $0x240] sm:$0xff]
      %v1619 = vld [vmem:[%s9 + $0x248] sm:$0xff]
      %v1620 = vld [vmem:[%s9 + $0x250] sm:$0xff]
      %v1621 = vld [vmem:[%s9 + $0x258] sm:$0xff]
      %v1622 = vld [vmem:[%s9 + $0x260] sm:$0xff]
      %v1623 = vld [vmem:[%s9 + $0x268] sm:$0xff]
      %v1624 = vld [vmem:[%s9 + $0x270] sm:$0xff]
      %v1625 = vld [vmem:[%s9 + $0x278] sm:$0xff]
      %v1626 = vld [vmem:[%s9 + $0x280] sm:$0xff]
      %v1627 = vld [vmem:[%s9 + $0x288] sm:$0xff]
      %v1628 = vld [vmem:[%s9 + $0x290] sm:$0xff]
      %v1629 = vld [vmem:[%s9 + $0x298] sm:$0xff]
      %v1630 = vld [vmem:[%s9 + $0x2a0] sm:$0xff]
      %v1631 = vld [vmem:[%s9 + $0x2a8] sm:$0xff]
      %v1632 = vld [vmem:[%s9 + $0x2b0] sm:$0xff]
      %v1633 = vld [vmem:[%s9 + $0x2b8] sm:$0xff]
      %v1634 = vld [vmem:[%s9 + $0x2c0] sm:$0xff]
      %v1635 = vld [vmem:[%s9 + $0x2c8] sm:$0xff]
      %v1636 = vld [vmem:[%s9 + $0x2d0] sm:$0xff]
      %v1637 = vld [vmem:[%s9 + $0x2d8] sm:$0xff]
      %v1638 = vld [vmem:[%s9 + $0x2e0] sm:$0xff]
      %v1639 = vld [vmem:[%s9 + $0x2e8] sm:$0xff]
      %v1640 = vld [vmem:[%s9 + $0x2f0] sm:$0xff]
      %v1641 = vld [vmem:[%s9 + $0x2f8] sm:$0xff]
      %v1642 = vld [vmem:[%s9 + $0x300] sm:$0xff]
      %v1643 = vld [vmem:[%s9 + $0x308] sm:$0xff]
      %v1644 = vld [vmem:[%s9 + $0x310] sm:$0xff]
      %v1645 = vld [vmem:[%s9 + $0x318] sm:$0xff]
      %v1646 = vld [vmem:[%s9 + $0x320] sm:$0xff]
      %v1647 = vld [vmem:[%s9 + $0x328] sm:$0xff]
      %v1648 = vld [vmem:[%s9 + $0x330] sm:$0xff]
      %v1649 = vld [vmem:[%s9 + $0x338] sm:$0xff]
      %v1650 = vld [vmem:[%s9 + $0x340] sm:$0xff]
      %v1651 = vld [vmem:[%s9 + $0x348] sm:$0xff]
      %v1652 = vld [vmem:[%s9 + $0x350] sm:$0xff]
      %v1653 = vld [vmem:[%s9 + $0x358] sm:$0xff]
      %v1654 = vld [vmem:[%s9 + $0x360] sm:$0xff]
      %v1655 = vld [vmem:[%s9 + $0x368] sm:$0xff]
      %v1656 = vld [vmem:[%s9 + $0x370] sm:$0xff]
      %v1657 = vld [vmem:[%s9 + $0x378] sm:$0xff]
      %v1658 = vld [vmem:[%s9 + $0x380] sm:$0xff]
      %v1659 = vld [vmem:[%s9 + $0x388] sm:$0xff]
      %v1660 = vld [vmem:[%s9 + $0x390] sm:$0xff]
      %v1661 = vld [vmem:[%s9 + $0x398] sm:$0xff]
      %v1662 = vld [vmem:[%s9 + $0x3a0] sm:$0xff]
      %v1663 = vld [vmem:[%s9 + $0x3a8] sm:$0xff]
      %v1664 = vld [vmem:[%s9 + $0x3b0] sm:$0xff]
      %v1665 = vld [vmem:[%s9 + $0x3b8] sm:$0xff]
      %v1666 = vld [vmem:[%s9 + $0x3c0] sm:$0xff]
      %v1667 = vld [vmem:[%s9 + $0x3c8] sm:$0xff]
      %v1668 = vld [vmem:[%s9 + $0x3d0] sm:$0xff]
      %v1669 = vld [vmem:[%s9 + $0x3d8] sm:$0xff]
      %v1670 = vld [vmem:[%s9 + $0x3e0] sm:$0xff]
      %v1671 = vld [vmem:[%s9 + $0x3e8] sm:$0xff]
      %v1672 = vld [vmem:[%s9 + $0x3f0] sm:$0xff]
      %v1673 = vld [vmem:[%s9 + $0x3f8] sm:$0xff]
      %v1674 = vld [vmem:[%s9 + $0x400] sm:$0xff]
      %v1675 = vld [vmem:[%s9 + $0x408] sm:$0xff]
      %v1676 = vld [vmem:[%s9 + $0x410] sm:$0xff]
      %v1677 = vld [vmem:[%s9 + $0x418] sm:$0xff]
      %v1678 = vld [vmem:[%s9 + $0x420] sm:$0xff]
      %v1679 = vld [vmem:[%s9 + $0x428] sm:$0xff]
      %v1680 = vld [vmem:[%s9 + $0x430] sm:$0xff]
      %v1681 = vld [vmem:[%s9 + $0x438] sm:$0xff]
      %v1682 = vld [vmem:[%s9 + $0x440] sm:$0xff]
      %v1683 = vld [vmem:[%s9 + $0x448] sm:$0xff]
      %v1684 = vld [vmem:[%s9 + $0x450] sm:$0xff]
      %v1685 = vld [vmem:[%s9 + $0x458] sm:$0xff]
      %v1686 = vld [vmem:[%s9 + $0x460] sm:$0xff]
      %v1687 = vld [vmem:[%s9 + $0x468] sm:$0xff]
      %v1688 = vld [vmem:[%s9 + $0x470] sm:$0xff]
      %v1689 = vld [vmem:[%s9 + $0x478] sm:$0xff]
      %v1690 = vld [vmem:[%s9 + $0x480] sm:$0xff]
      %v1691 = vld [vmem:[%s9 + $0x488] sm:$0xff]
      %v1692 = vld [vmem:[%s9 + $0x490] sm:$0xff]
      %v1693 = vld [vmem:[%s9 + $0x498] sm:$0xff]
      %v1694 = vld [vmem:[%s9 + $0x4a0] sm:$0xff]
      %v1695 = vld [vmem:[%s9 + $0x4a8] sm:$0xff]
      %v1696 = vld [vmem:[%s9 + $0x4b0] sm:$0xff]
      %v1697 = vld [vmem:[%s9 + $0x4b8] sm:$0xff]
      %v1698 = vld [vmem:[%s9 + $0x4c0] sm:$0xff]
      %v1699 = vld [vmem:[%s9 + $0x4c8] sm:$0xff]
      %v1700 = vld [vmem:[%s9 + $0x4d0] sm:$0xff]
      %v1701 = vld [vmem:[%s9 + $0x4d8] sm:$0xff]
      %v1702 = vld [vmem:[%s9 + $0x4e0] sm:$0xff]
      %v1703 = vld [vmem:[%s9 + $0x4e8] sm:$0xff]
      %v1704 = vld [vmem:[%s9 + $0x4f0] sm:$0xff]
      %v1705 = vld [vmem:[%s9 + $0x4f8] sm:$0xff]
      %v1706 = vld [vmem:[%s9 + $0x500] sm:$0xff]
      %v1707 = vld [vmem:[%s9 + $0x508] sm:$0xff]
      %v1708 = vld [vmem:[%s9 + $0x510] sm:$0xff]
      %v1709 = vld [vmem:[%s9 + $0x518] sm:$0xff]
      %v1710 = vld [vmem:[%s9 + $0x520] sm:$0xff]
      %v1711 = vld [vmem:[%s9 + $0x528] sm:$0xff]
      %v1712 = vld [vmem:[%s9 + $0x530] sm:$0xff]
      %v1713 = vld [vmem:[%s9 + $0x538] sm:$0xff]
      %v1714 = vld [vmem:[%s9 + $0x540] sm:$0xff]
      %v1715 = vld [vmem:[%s9 + $0x548] sm:$0xff]
      %v1716 = vld [vmem:[%s9 + $0x550] sm:$0xff]
      %v1717 = vld [vmem:[%s9 + $0x558] sm:$0xff]
      %v1718 = vld [vmem:[%s9 + $0x560] sm:$0xff]
      %v1719 = vld [vmem:[%s9 + $0x568] sm:$0xff]
      %v1720 = vld [vmem:[%s9 + $0x570] sm:$0xff]
      %v1721 = vld [vmem:[%s9 + $0x578] sm:$0xff]
      %v1722 = vld [vmem:[%s9 + $0x580] sm:$0xff]
      %v1723 = vld [vmem:[%s9 + $0x588] sm:$0xff]
      %v1724 = vld [vmem:[%s9 + $0x590] sm:$0xff]
      %v1725 = vld [vmem:[%s9 + $0x598] sm:$0xff]
      %v1726 = vld [vmem:[%s9 + $0x5a0] sm:$0xff]
      %v1727 = vld [vmem:[%s9 + $0x5a8] sm:$0xff]
      %v1728 = vld [vmem:[%s9 + $0x5b0] sm:$0xff]
      %v1729 = vld [vmem:[%s9 + $0x5b8] sm:$0xff]
      %v1730 = vld [vmem:[%s9 + $0x5c0] sm:$0xff]
      %v1731 = vld [vmem:[%s9 + $0x5c8] sm:$0xff]
      %v1732 = vld [vmem:[%s9 + $0x5d0] sm:$0xff]
      %v1733 = vld [vmem:[%s9 + $0x5d8] sm:$0xff]
      %v1734 = vld [vmem:[%s9 + $0x5e0] sm:$0xff]
      %v1735 = vld [vmem:[%s9 + $0x5e8] sm:$0xff]
      %v1736 = vld [vmem:[%s9 + $0x5f0] sm:$0xff]
      %v1737 = vld [vmem:[%s9 + $0x5f8] sm:$0xff]
      %v1738 = vld [vmem:[%s9 + $0x600] sm:$0xff]
      %v1739 = vld [vmem:[%s9 + $0x608] sm:$0xff]
      %v1740 = vld [vmem:[%s9 + $0x610] sm:$0xff]
      %v1741 = vld [vmem:[%s9 + $0x618] sm:$0xff]
      %v1742 = vld [vmem:[%s9 + $0x620] sm:$0xff]
      %v1743 = vld [vmem:[%s9 + $0x628] sm:$0xff]
      %v1744 = vld [vmem:[%s9 + $0x630] sm:$0xff]
      %v1745 = vld [vmem:[%s9 + $0x638] sm:$0xff]
      %v1746 = vld [vmem:[%s9 + $0x640] sm:$0xff]
      %v1747 = vld [vmem:[%s9 + $0x648] sm:$0xff]
      %v1748 = vld [vmem:[%s9 + $0x650] sm:$0xff]
      %v1749 = vld [vmem:[%s9 + $0x658] sm:$0xff]
      %v1750 = vld [vmem:[%s9 + $0x660] sm:$0xff]
      %v1751 = vld [vmem:[%s9 + $0x668] sm:$0xff]
      %v1752 = vld [vmem:[%s9 + $0x670] sm:$0xff]
      %v1753 = vld [vmem:[%s9 + $0x678] sm:$0xff]
      %v1754 = vld [vmem:[%s9 + $0x680] sm:$0xff]
      %v1755 = vld [vmem:[%s9 + $0x688] sm:$0xff]
      %v1756 = vld [vmem:[%s9 + $0x690] sm:$0xff]
      %v1757 = vld [vmem:[%s9 + $0x698] sm:$0xff]
      %v1758 = vld [vmem:[%s9 + $0x6a0] sm:$0xff]
      %v1759 = vld [vmem:[%s9 + $0x6a8] sm:$0xff]
      %v1760 = vld [vmem:[%s9 + $0x6b0] sm:$0xff]
      %v1761 = vld [vmem:[%s9 + $0x6b8] sm:$0xff]
      %v1762 = vld [vmem:[%s9 + $0x6c0] sm:$0xff]
      %v1763 = vld [vmem:[%s9 + $0x6c8] sm:$0xff]
      %v1764 = vld [vmem:[%s9 + $0x6d0] sm:$0xff]
      %v1765 = vld [vmem:[%s9 + $0x6d8] sm:$0xff]
      %v1766 = vld [vmem:[%s9 + $0x6e0] sm:$0xff]
      %v1767 = vld [vmem:[%s9 + $0x6e8] sm:$0xff]
      %v1768 = vld [vmem:[%s9 + $0x6f0] sm:$0xff]
      %v1769 = vld [vmem:[%s9 + $0x6f8] sm:$0xff]
      %v1770 = vld [vmem:[%s10] sm:$0x1]
      %1771 = vmatprep.subr.mxu0 0.0
      %1772 = vmatpush1.msra.mxu0 %v1561
      %1773 = vmatprep.subr.mxu0 0.0
      %1774 = vmatpush1.msra.mxu0 %v1560
      %1775 = vmatprep.subr.mxu0 0.0
      %1776 = vmatpush1.msra.mxu0 %v1559
      %1777 = vmatprep.subr.mxu0 0.0
      %1778 = vmatpush1.msra.mxu0 %v1558
      %1779 = vmatprep.subr.mxu0 0.0
      %1780 = vmatpush1.msra.mxu0 %v1557
      %1781 = vmatprep.subr.mxu0 0.0
      %1782 = vmatpush1.msra.mxu0 %v1556
      %1783 = vmatprep.subr.mxu0 0.0
      %1784 = vmatpush1.msra.mxu0 %v1555
      %1785 = vmatprep.subr.mxu0 0.0
      %1786 = vmatpush1.msra.mxu0 %v1554
      %1787 = vmatprep.subr.mxu0 0.0
      %1788 = vmatpush1.msra.mxu0 %v1553
      %1789 = vmatprep.subr.mxu0 0.0
      %1790 = vmatpush1.msra.mxu0 %v1552
      %1791 = vmatprep.subr.mxu0 0.0
      %1792 = vmatpush1.msra.mxu0 %v1551
      %1793 = vmatprep.subr.mxu0 0.0
      %1794 = vmatpush1.msra.mxu0 %v1550
      %1795 = vmatprep.subr.mxu0 0.0
      %1796 = vmatpush1.msra.mxu0 %v1549
      %1797 = vmatprep.subr.mxu0 0.0
      %1798 = vmatpush1.msra.mxu0 %v1548
      %1799 = vmatprep.subr.mxu0 0.0
      %1800 = vmatpush1.msra.mxu0 %v1547
      %1801 = vmatprep.subr.mxu0 0.0
      %1802 = vmatpush1.msra.mxu0 %v1546
      %1803 = vmatprep.subr.mxu0 0.0
      %1804 = vmatpush2.msra.mxu0 %v1577
      %1805 = vmatprep.subr.mxu0 0.0
      %1806 = vmatpush2.msra.mxu0 %v1576
      %1807 = vmatprep.subr.mxu0 0.0
      %1808 = vmatpush2.msra.mxu0 %v1575
      %1809 = vmatprep.subr.mxu0 0.0
      %1810 = vmatpush2.msra.mxu0 %v1574
      %1811 = vmatprep.subr.mxu0 0.0
      %1812 = vmatpush2.msra.mxu0 %v1573
      %1813 = vmatprep.subr.mxu0 0.0
      %1814 = vmatpush2.msra.mxu0 %v1572
      %1815 = vmatprep.subr.mxu0 0.0
      %1816 = vmatpush2.msra.mxu0 %v1571
      %1817 = vmatprep.subr.mxu0 0.0
      %1818 = vmatpush2.msra.mxu0 %v1570
      %1819 = vmatprep.subr.mxu0 0.0
      %1820 = vmatpush2.msra.mxu0 %v1569
      %1821 = vmatprep.subr.mxu0 0.0
      %1822 = vmatpush2.msra.mxu0 %v1568
      %1823 = vmatprep.subr.mxu0 0.0
      %1824 = vmatpush2.msra.mxu0 %v1567
      %1825 = vmatprep.subr.mxu0 0.0
      %1826 = vmatpush2.msra.mxu0 %v1566
      %1827 = vmatprep.subr.mxu0 0.0
      %1828 = vmatpush2.msra.mxu0 %v1565
      %1829 = vmatprep.subr.mxu0 0.0
      %1830 = vmatpush2.msra.mxu0 %v1564
      %1831 = vmatprep.subr.mxu0 0.0
      %1832 = vmatpush2.msra.mxu0 %v1563
      %1833 = vmatprep.subr.mxu0 0.0
      %1834 = vmatpush2.msra.mxu0 %v1562
      %1835 = vmatprep.mubr.f32.mxu0 %v1499
      %1836 = vmatmul.mubr.f32.gmra.mxu0 %v1498
      %v1837 = vpop.f32.mrf.mxu0
      %v1838 = vadd.f32 %v1770, %v1837
      %v1839 = vpop.f32.mrf.mxu0
      %1840 = vdwg.mxu0
      %1841 = vmatprep.subr.mxu0 0.0
      %1842 = vmatpush1.msra.mxu0 %v1593
      %1843 = vmatprep.subr.mxu0 0.0
      %1844 = vmatpush1.msra.mxu0 %v1592
      %1845 = vmatprep.subr.mxu0 0.0
      %1846 = vmatpush1.msra.mxu0 %v1591
      %1847 = vmatprep.subr.mxu0 0.0
      %1848 = vmatpush1.msra.mxu0 %v1590
      %1849 = vmatprep.subr.mxu0 0.0
      %1850 = vmatpush1.msra.mxu0 %v1589
      %1851 = vmatprep.subr.mxu0 0.0
      %1852 = vmatpush1.msra.mxu0 %v1588
      %1853 = vmatprep.subr.mxu0 0.0
      %1854 = vmatpush1.msra.mxu0 %v1587
      %1855 = vmatprep.subr.mxu0 0.0
      %1856 = vmatpush1.msra.mxu0 %v1586
      %1857 = vmatprep.subr.mxu0 0.0
      %1858 = vmatpush1.msra.mxu0 %v1585
      %1859 = vmatprep.subr.mxu0 0.0
      %1860 = vmatpush1.msra.mxu0 %v1584
      %1861 = vmatprep.subr.mxu0 0.0
      %1862 = vmatpush1.msra.mxu0 %v1583
      %1863 = vmatprep.subr.mxu0 0.0
      %1864 = vmatpush1.msra.mxu0 %v1582
      %1865 = vmatprep.subr.mxu0 0.0
      %1866 = vmatpush1.msra.mxu0 %v1581
      %1867 = vmatprep.subr.mxu0 0.0
      %1868 = vmatpush1.msra.mxu0 %v1580
      %1869 = vmatprep.subr.mxu0 0.0
      %1870 = vmatpush1.msra.mxu0 %v1579
      %1871 = vmatprep.subr.mxu0 0.0
      %1872 = vmatpush1.msra.mxu0 %v1578
      %1873 = vmatprep.subr.mxu0 0.0
      %1874 = vmatpush2.msra.mxu0 %v1609
      %1875 = vmatprep.subr.mxu0 0.0
      %1876 = vmatpush2.msra.mxu0 %v1608
      %1877 = vmatprep.subr.mxu0 0.0
      %1878 = vmatpush2.msra.mxu0 %v1607
      %1879 = vmatprep.subr.mxu0 0.0
      %1880 = vmatpush2.msra.mxu0 %v1606
      %1881 = vmatprep.subr.mxu0 0.0
      %1882 = vmatpush2.msra.mxu0 %v1605
      %1883 = vmatprep.subr.mxu0 0.0
      %1884 = vmatpush2.msra.mxu0 %v1604
      %1885 = vmatprep.subr.mxu0 0.0
      %1886 = vmatpush2.msra.mxu0 %v1603
      %1887 = vmatprep.subr.mxu0 0.0
      %1888 = vmatpush2.msra.mxu0 %v1602
      %1889 = vmatprep.subr.mxu0 0.0
      %1890 = vmatpush2.msra.mxu0 %v1601
      %1891 = vmatprep.subr.mxu0 0.0
      %1892 = vmatpush2.msra.mxu0 %v1600
      %1893 = vmatprep.subr.mxu0 0.0
      %1894 = vmatpush2.msra.mxu0 %v1599
      %1895 = vmatprep.subr.mxu0 0.0
      %1896 = vmatpush2.msra.mxu0 %v1598
      %1897 = vmatprep.subr.mxu0 0.0
      %1898 = vmatpush2.msra.mxu0 %v1597
      %1899 = vmatprep.subr.mxu0 0.0
      %1900 = vmatpush2.msra.mxu0 %v1596
      %1901 = vmatprep.subr.mxu0 0.0
      %1902 = vmatpush2.msra.mxu0 %v1595
      %1903 = vmatprep.subr.mxu0 0.0
      %1904 = vmatpush2.msra.mxu0 %v1594
      %1905 = vmatprep.mubr.f32.mxu0 %v1501
      %1906 = vmatmul.mubr.f32.gmra.mxu0 %v1500
      %v1907 = vpop.f32.mrf.mxu0
      %v1908 = vadd.f32 %v1838, %v1907
      %v1909 = vpop.f32.mrf.mxu0
      %1910 = vdwg.mxu0
      %1911 = vmatprep.subr.mxu0 0.0
      %1912 = vmatpush1.msra.mxu0 %v1625
      %1913 = vmatprep.subr.mxu0 0.0
      %1914 = vmatpush1.msra.mxu0 %v1624
      %1915 = vmatprep.subr.mxu0 0.0
      %1916 = vmatpush1.msra.mxu0 %v1623
      %1917 = vmatprep.subr.mxu0 0.0
      %1918 = vmatpush1.msra.mxu0 %v1622
      %1919 = vmatprep.subr.mxu0 0.0
      %1920 = vmatpush1.msra.mxu0 %v1621
      %1921 = vmatprep.subr.mxu0 0.0
      %1922 = vmatpush1.msra.mxu0 %v1620
      %1923 = vmatprep.subr.mxu0 0.0
      %1924 = vmatpush1.msra.mxu0 %v1619
      %1925 = vmatprep.subr.mxu0 0.0
      %1926 = vmatpush1.msra.mxu0 %v1618
      %1927 = vmatprep.subr.mxu0 0.0
      %1928 = vmatpush1.msra.mxu0 %v1617
      %1929 = vmatprep.subr.mxu0 0.0
      %1930 = vmatpush1.msra.mxu0 %v1616
      %1931 = vmatprep.subr.mxu0 0.0
      %1932 = vmatpush1.msra.mxu0 %v1615
      %1933 = vmatprep.subr.mxu0 0.0
      %1934 = vmatpush1.msra.mxu0 %v1614
      %1935 = vmatprep.subr.mxu0 0.0
      %1936 = vmatpush1.msra.mxu0 %v1613
      %1937 = vmatprep.subr.mxu0 0.0
      %1938 = vmatpush1.msra.mxu0 %v1612
      %1939 = vmatprep.subr.mxu0 0.0
      %1940 = vmatpush1.msra.mxu0 %v1611
      %1941 = vmatprep.subr.mxu0 0.0
      %1942 = vmatpush1.msra.mxu0 %v1610
      %1943 = vmatprep.subr.mxu0 0.0
      %1944 = vmatpush2.msra.mxu0 %v1641
      %1945 = vmatprep.subr.mxu0 0.0
      %1946 = vmatpush2.msra.mxu0 %v1640
      %1947 = vmatprep.subr.mxu0 0.0
      %1948 = vmatpush2.msra.mxu0 %v1639
      %1949 = vmatprep.subr.mxu0 0.0
      %1950 = vmatpush2.msra.mxu0 %v1638
      %1951 = vmatprep.subr.mxu0 0.0
      %1952 = vmatpush2.msra.mxu0 %v1637
      %1953 = vmatprep.subr.mxu0 0.0
      %1954 = vmatpush2.msra.mxu0 %v1636
      %1955 = vmatprep.subr.mxu0 0.0
      %1956 = vmatpush2.msra.mxu0 %v1635
      %1957 = vmatprep.subr.mxu0 0.0
      %1958 = vmatpush2.msra.mxu0 %v1634
      %1959 = vmatprep.subr.mxu0 0.0
      %1960 = vmatpush2.msra.mxu0 %v1633
      %1961 = vmatprep.subr.mxu0 0.0
      %1962 = vmatpush2.msra.mxu0 %v1632
      %1963 = vmatprep.subr.mxu0 0.0
      %1964 = vmatpush2.msra.mxu0 %v1631
      %1965 = vmatprep.subr.mxu0 0.0
      %1966 = vmatpush2.msra.mxu0 %v1630
      %1967 = vmatprep.subr.mxu0 0.0
      %1968 = vmatpush2.msra.mxu0 %v1629
      %1969 = vmatprep.subr.mxu0 0.0
      %1970 = vmatpush2.msra.mxu0 %v1628
      %1971 = vmatprep.subr.mxu0 0.0
      %1972 = vmatpush2.msra.mxu0 %v1627
      %1973 = vmatprep.subr.mxu0 0.0
      %1974 = vmatpush2.msra.mxu0 %v1626
      %1975 = vmatprep.mubr.f32.mxu0 %v1503
      %1976 = vmatmul.mubr.f32.gmra.mxu0 %v1502
      %v1977 = vpop.f32.mrf.mxu0
      %v1978 = vadd.f32 %v1908, %v1977
      %v1979 = vpop.f32.mrf.mxu0
      %1980 = vdwg.mxu0
      %1981 = vmatprep.subr.mxu0 0.0
      %1982 = vmatpush1.msra.mxu0 %v1657
      %1983 = vmatprep.subr.mxu0 0.0
      %1984 = vmatpush1.msra.mxu0 %v1656
      %1985 = vmatprep.subr.mxu0 0.0
      %1986 = vmatpush1.msra.mxu0 %v1655
      %1987 = vmatprep.subr.mxu0 0.0
      %1988 = vmatpush1.msra.mxu0 %v1654
      %1989 = vmatprep.subr.mxu0 0.0
      %1990 = vmatpush1.msra.mxu0 %v1653
      %1991 = vmatprep.subr.mxu0 0.0
      %1992 = vmatpush1.msra.mxu0 %v1652
      %1993 = vmatprep.subr.mxu0 0.0
      %1994 = vmatpush1.msra.mxu0 %v1651
      %1995 = vmatprep.subr.mxu0 0.0
      %1996 = vmatpush1.msra.mxu0 %v1650
      %1997 = vmatprep.subr.mxu0 0.0
      %1998 = vmatpush1.msra.mxu0 %v1649
      %1999 = vmatprep.subr.mxu0 0.0
      %2000 = vmatpush1.msra.mxu0 %v1648
      %2001 = vmatprep.subr.mxu0 0.0
      %2002 = vmatpush1.msra.mxu0 %v1647
      %2003 = vmatprep.subr.mxu0 0.0
      %2004 = vmatpush1.msra.mxu0 %v1646
      %2005 = vmatprep.subr.mxu0 0.0
      %2006 = vmatpush1.msra.mxu0 %v1645
      %2007 = vmatprep.subr.mxu0 0.0
      %2008 = vmatpush1.msra.mxu0 %v1644
      %2009 = vmatprep.subr.mxu0 0.0
      %2010 = vmatpush1.msra.mxu0 %v1643
      %2011 = vmatprep.subr.mxu0 0.0
      %2012 = vmatpush1.msra.mxu0 %v1642
      %2013 = vmatprep.subr.mxu0 0.0
      %2014 = vmatpush2.msra.mxu0 %v1673
      %2015 = vmatprep.subr.mxu0 0.0
      %2016 = vmatpush2.msra.mxu0 %v1672
      %2017 = vmatprep.subr.mxu0 0.0
      %2018 = vmatpush2.msra.mxu0 %v1671
      %2019 = vmatprep.subr.mxu0 0.0
      %2020 = vmatpush2.msra.mxu0 %v1670
      %2021 = vmatprep.subr.mxu0 0.0
      %2022 = vmatpush2.msra.mxu0 %v1669
      %2023 = vmatprep.subr.mxu0 0.0
      %2024 = vmatpush2.msra.mxu0 %v1668
      %2025 = vmatprep.subr.mxu0 0.0
      %2026 = vmatpush2.msra.mxu0 %v1667
      %2027 = vmatprep.subr.mxu0 0.0
      %2028 = vmatpush2.msra.mxu0 %v1666
      %2029 = vmatprep.subr.mxu0 0.0
      %2030 = vmatpush2.msra.mxu0 %v1665
      %2031 = vmatprep.subr.mxu0 0.0
      %2032 = vmatpush2.msra.mxu0 %v1664
      %2033 = vmatprep.subr.mxu0 0.0
      %2034 = vmatpush2.msra.mxu0 %v1663
      %2035 = vmatprep.subr.mxu0 0.0
      %2036 = vmatpush2.msra.mxu0 %v1662
      %2037 = vmatprep.subr.mxu0 0.0
      %2038 = vmatpush2.msra.mxu0 %v1661
      %2039 = vmatprep.subr.mxu0 0.0
      %2040 = vmatpush2.msra.mxu0 %v1660
      %2041 = vmatprep.subr.mxu0 0.0
      %2042 = vmatpush2.msra.mxu0 %v1659
      %2043 = vmatprep.subr.mxu0 0.0
      %2044 = vmatpush2.msra.mxu0 %v1658
      %2045 = vmatprep.mubr.f32.mxu0 %v1505
      %2046 = vmatmul.mubr.f32.gmra.mxu0 %v1504
      %v2047 = vpop.f32.mrf.mxu0
      %v2048 = vadd.f32 %v1978, %v2047
      %v2049 = vpop.f32.mrf.mxu0
      %2050 = vdwg.mxu0
      %2051 = vmatprep.subr.mxu0 0.0
      %2052 = vmatpush1.msra.mxu0 %v1689
      %2053 = vmatprep.subr.mxu0 0.0
      %2054 = vmatpush1.msra.mxu0 %v1688
      %2055 = vmatprep.subr.mxu0 0.0
      %2056 = vmatpush1.msra.mxu0 %v1687
      %2057 = vmatprep.subr.mxu0 0.0
      %2058 = vmatpush1.msra.mxu0 %v1686
      %2059 = vmatprep.subr.mxu0 0.0
      %2060 = vmatpush1.msra.mxu0 %v1685
      %2061 = vmatprep.subr.mxu0 0.0
      %2062 = vmatpush1.msra.mxu0 %v1684
      %2063 = vmatprep.subr.mxu0 0.0
      %2064 = vmatpush1.msra.mxu0 %v1683
      %2065 = vmatprep.subr.mxu0 0.0
      %2066 = vmatpush1.msra.mxu0 %v1682
      %2067 = vmatprep.subr.mxu0 0.0
      %2068 = vmatpush1.msra.mxu0 %v1681
      %2069 = vmatprep.subr.mxu0 0.0
      %2070 = vmatpush1.msra.mxu0 %v1680
      %2071 = vmatprep.subr.mxu0 0.0
      %2072 = vmatpush1.msra.mxu0 %v1679
      %2073 = vmatprep.subr.mxu0 0.0
      %2074 = vmatpush1.msra.mxu0 %v1678
      %2075 = vmatprep.subr.mxu0 0.0
      %2076 = vmatpush1.msra.mxu0 %v1677
      %2077 = vmatprep.subr.mxu0 0.0
      %2078 = vmatpush1.msra.mxu0 %v1676
      %2079 = vmatprep.subr.mxu0 0.0
      %2080 = vmatpush1.msra.mxu0 %v1675
      %2081 = vmatprep.subr.mxu0 0.0
      %2082 = vmatpush1.msra.mxu0 %v1674
      %2083 = vmatprep.subr.mxu0 0.0
      %2084 = vmatpush2.msra.mxu0 %v1705
      %2085 = vmatprep.subr.mxu0 0.0
      %2086 = vmatpush2.msra.mxu0 %v1704
      %2087 = vmatprep.subr.mxu0 0.0
      %2088 = vmatpush2.msra.mxu0 %v1703
      %2089 = vmatprep.subr.mxu0 0.0
      %2090 = vmatpush2.msra.mxu0 %v1702
      %2091 = vmatprep.subr.mxu0 0.0
      %2092 = vmatpush2.msra.mxu0 %v1701
      %2093 = vmatprep.subr.mxu0 0.0
      %2094 = vmatpush2.msra.mxu0 %v1700
      %2095 = vmatprep.subr.mxu0 0.0
      %2096 = vmatpush2.msra.mxu0 %v1699
      %2097 = vmatprep.subr.mxu0 0.0
      %2098 = vmatpush2.msra.mxu0 %v1698
      %2099 = vmatprep.subr.mxu0 0.0
      %2100 = vmatpush2.msra.mxu0 %v1697
      %2101 = vmatprep.subr.mxu0 0.0
      %2102 = vmatpush2.msra.mxu0 %v1696
      %2103 = vmatprep.subr.mxu0 0.0
      %2104 = vmatpush2.msra.mxu0 %v1695
      %2105 = vmatprep.subr.mxu0 0.0
      %2106 = vmatpush2.msra.mxu0 %v1694
      %2107 = vmatprep.subr.mxu0 0.0
      %2108 = vmatpush2.msra.mxu0 %v1693
      %2109 = vmatprep.subr.mxu0 0.0
      %2110 = vmatpush2.msra.mxu0 %v1692
      %2111 = vmatprep.subr.mxu0 0.0
      %2112 = vmatpush2.msra.mxu0 %v1691
      %2113 = vmatprep.subr.mxu0 0.0
      %2114 = vmatpush2.msra.mxu0 %v1690
      %2115 = vmatprep.mubr.f32.mxu0 %v1541
      %2116 = vmatmul.mubr.f32.gmra.mxu0 %v1540
      %v2117 = vpop.f32.mrf.mxu0
      %v2118 = vadd.f32 %v2048, %v2117
      %v2119 = vpop.f32.mrf.mxu0
      %2120 = vdwg.mxu0
      %2121 = vmatprep.subr.mxu0 0.0
      %2122 = vmatpush1.msra.mxu0 %v1721
      %2123 = vmatprep.subr.mxu0 0.0
      %2124 = vmatpush1.msra.mxu0 %v1720
      %2125 = vmatprep.subr.mxu0 0.0
      %2126 = vmatpush1.msra.mxu0 %v1719
      %2127 = vmatprep.subr.mxu0 0.0
      %2128 = vmatpush1.msra.mxu0 %v1718
      %2129 = vmatprep.subr.mxu0 0.0
      %2130 = vmatpush1.msra.mxu0 %v1717
      %2131 = vmatprep.subr.mxu0 0.0
      %2132 = vmatpush1.msra.mxu0 %v1716
      %2133 = vmatprep.subr.mxu0 0.0
      %2134 = vmatpush1.msra.mxu0 %v1715
      %2135 = vmatprep.subr.mxu0 0.0
      %2136 = vmatpush1.msra.mxu0 %v1714
      %2137 = vmatprep.subr.mxu0 0.0
      %2138 = vmatpush1.msra.mxu0 %v1713
      %2139 = vmatprep.subr.mxu0 0.0
      %2140 = vmatpush1.msra.mxu0 %v1712
      %2141 = vmatprep.subr.mxu0 0.0
      %2142 = vmatpush1.msra.mxu0 %v1711
      %2143 = vmatprep.subr.mxu0 0.0
      %2144 = vmatpush1.msra.mxu0 %v1710
      %2145 = vmatprep.subr.mxu0 0.0
      %2146 = vmatpush1.msra.mxu0 %v1709
      %2147 = vmatprep.subr.mxu0 0.0
      %2148 = vmatpush1.msra.mxu0 %v1708
      %2149 = vmatprep.subr.mxu0 0.0
      %2150 = vmatpush1.msra.mxu0 %v1707
      %2151 = vmatprep.subr.mxu0 0.0
      %2152 = vmatpush1.msra.mxu0 %v1706
      %2153 = vmatprep.subr.mxu0 0.0
      %2154 = vmatpush2.msra.mxu0 %v1737
      %2155 = vmatprep.subr.mxu0 0.0
      %2156 = vmatpush2.msra.mxu0 %v1736
      %2157 = vmatprep.subr.mxu0 0.0
      %2158 = vmatpush2.msra.mxu0 %v1735
      %2159 = vmatprep.subr.mxu0 0.0
      %2160 = vmatpush2.msra.mxu0 %v1734
      %2161 = vmatprep.subr.mxu0 0.0
      %2162 = vmatpush2.msra.mxu0 %v1733
      %2163 = vmatprep.subr.mxu0 0.0
      %2164 = vmatpush2.msra.mxu0 %v1732
      %2165 = vmatprep.subr.mxu0 0.0
      %2166 = vmatpush2.msra.mxu0 %v1731
      %2167 = vmatprep.subr.mxu0 0.0
      %2168 = vmatpush2.msra.mxu0 %v1730
      %2169 = vmatprep.subr.mxu0 0.0
      %2170 = vmatpush2.msra.mxu0 %v1729
      %2171 = vmatprep.subr.mxu0 0.0
      %2172 = vmatpush2.msra.mxu0 %v1728
      %2173 = vmatprep.subr.mxu0 0.0
      %2174 = vmatpush2.msra.mxu0 %v1727
      %2175 = vmatprep.subr.mxu0 0.0
      %2176 = vmatpush2.msra.mxu0 %v1726
      %2177 = vmatprep.subr.mxu0 0.0
      %2178 = vmatpush2.msra.mxu0 %v1725
      %2179 = vmatprep.subr.mxu0 0.0
      %2180 = vmatpush2.msra.mxu0 %v1724
      %2181 = vmatprep.subr.mxu0 0.0
      %2182 = vmatpush2.msra.mxu0 %v1723
      %2183 = vmatprep.subr.mxu0 0.0
      %2184 = vmatpush2.msra.mxu0 %v1722
      %2185 = vmatprep.mubr.f32.mxu0 %v1543
      %2186 = vmatmul.mubr.f32.gmra.mxu0 %v1542
      %v2187 = vpop.f32.mrf.mxu0
      %v2188 = vadd.f32 %v2118, %v2187
      %v2189 = vpop.f32.mrf.mxu0
      %2190 = vdwg.mxu0
      %2191 = vmatprep.subr.mxu0 0.0
      %2192 = vmatpush1.msra.mxu0 %v1753
      %2193 = vmatprep.subr.mxu0 0.0
      %2194 = vmatpush1.msra.mxu0 %v1752
      %2195 = vmatprep.subr.mxu0 0.0
      %2196 = vmatpush1.msra.mxu0 %v1751
      %2197 = vmatprep.subr.mxu0 0.0
      %2198 = vmatpush1.msra.mxu0 %v1750
      %2199 = vmatprep.subr.mxu0 0.0
      %2200 = vmatpush1.msra.mxu0 %v1749
      %2201 = vmatprep.subr.mxu0 0.0
      %2202 = vmatpush1.msra.mxu0 %v1748
      %2203 = vmatprep.subr.mxu0 0.0
      %2204 = vmatpush1.msra.mxu0 %v1747
      %2205 = vmatprep.subr.mxu0 0.0
      %2206 = vmatpush1.msra.mxu0 %v1746
      %2207 = vmatprep.subr.mxu0 0.0
      %2208 = vmatpush1.msra.mxu0 %v1745
      %2209 = vmatprep.subr.mxu0 0.0
      %2210 = vmatpush1.msra.mxu0 %v1744
      %2211 = vmatprep.subr.mxu0 0.0
      %2212 = vmatpush1.msra.mxu0 %v1743
      %2213 = vmatprep.subr.mxu0 0.0
      %2214 = vmatpush1.msra.mxu0 %v1742
      %2215 = vmatprep.subr.mxu0 0.0
      %2216 = vmatpush1.msra.mxu0 %v1741
      %2217 = vmatprep.subr.mxu0 0.0
      %2218 = vmatpush1.msra.mxu0 %v1740
      %2219 = vmatprep.subr.mxu0 0.0
      %2220 = vmatpush1.msra.mxu0 %v1739
      %2221 = vmatprep.subr.mxu0 0.0
      %2222 = vmatpush1.msra.mxu0 %v1738
      %2223 = vmatprep.subr.mxu0 0.0
      %2224 = vmatpush2.msra.mxu0 %v1769
      %2225 = vmatprep.subr.mxu0 0.0
      %2226 = vmatpush2.msra.mxu0 %v1768
      %2227 = vmatprep.subr.mxu0 0.0
      %2228 = vmatpush2.msra.mxu0 %v1767
      %2229 = vmatprep.subr.mxu0 0.0
      %2230 = vmatpush2.msra.mxu0 %v1766
      %2231 = vmatprep.subr.mxu0 0.0
      %2232 = vmatpush2.msra.mxu0 %v1765
      %2233 = vmatprep.subr.mxu0 0.0
      %2234 = vmatpush2.msra.mxu0 %v1764
      %2235 = vmatprep.subr.mxu0 0.0
      %2236 = vmatpush2.msra.mxu0 %v1763
      %2237 = vmatprep.subr.mxu0 0.0
      %2238 = vmatpush2.msra.mxu0 %v1762
      %2239 = vmatprep.subr.mxu0 0.0
      %2240 = vmatpush2.msra.mxu0 %v1761
      %2241 = vmatprep.subr.mxu0 0.0
      %2242 = vmatpush2.msra.mxu0 %v1760
      %2243 = vmatprep.subr.mxu0 0.0
      %2244 = vmatpush2.msra.mxu0 %v1759
      %2245 = vmatprep.subr.mxu0 0.0
      %2246 = vmatpush2.msra.mxu0 %v1758
      %2247 = vmatprep.subr.mxu0 0.0
      %2248 = vmatpush2.msra.mxu0 %v1757
      %2249 = vmatprep.subr.mxu0 0.0
      %2250 = vmatpush2.msra.mxu0 %v1756
      %2251 = vmatprep.subr.mxu0 0.0
      %2252 = vmatpush2.msra.mxu0 %v1755
      %2253 = vmatprep.subr.mxu0 0.0
      %2254 = vmatpush2.msra.mxu0 %v1754
      %2255 = vmatprep.mubr.f32.mxu0 %v1545
      %2256 = vmatmul.mubr.f32.gmra.mxu0 %v1544
      %v2257 = vpop.f32.mrf.mxu0
      %v2258 = vadd.f32 %v2188, %v2257
      %v2259 = vpop.f32.mrf.mxu0
      %2260 = vdwg.mxu0
      %v2261 = vmax.f32 %v2258, 0.0
      %v2262 = vld [vmem:[%s11] sm:$0xff]
      %v2263 = vld [vmem:[%s11 + $0x8] sm:$0xff]
      %v2264 = vld [vmem:[%s11 + $0x10] sm:$0xff]
      %v2265 = vld [vmem:[%s11 + $0x18] sm:$0xff]
      %v2266 = vld [vmem:[%s11 + $0x20] sm:$0xff]
      %v2267 = vld [vmem:[%s11 + $0x28] sm:$0xff]
      %v2268 = vld [vmem:[%s11 + $0x30] sm:$0xff]
      %v2269 = vld [vmem:[%s11 + $0x38] sm:$0xff]
      %v2270 = vld [vmem:[%s11 + $0x40] sm:$0xff]
      %v2271 = vld [vmem:[%s11 + $0x48] sm:$0xff]
      %v2272 = vld [vmem:[%s11 + $0x50] sm:$0xff]
      %v2273 = vld [vmem:[%s11 + $0x58] sm:$0xff]
      %v2274 = vld [vmem:[%s11 + $0x60] sm:$0xf]
      %v2275 = vld [vmem:[#allocation2] sm:$0x1]
      %vm2276 = vcmask 818176
      %v2278 = vsel %vm2276, %v2261, 0
      %v2281 = vsel %vm549, %v2274, 0
      %2283 = vmatprep.subr.mxu0 0.0
      %2284 = vmatpush1.msra.mxu0 0.0
      %2285 = vmatprep.subr.mxu0 0.0
      %2286 = vmatpush1.msra.mxu0 0.0
      %2287 = vmatprep.subr.mxu0 0.0
      %2288 = vmatpush1.msra.mxu0 0.0
      %2289 = vmatprep.subr.mxu0 0.0
      %2290 = vmatpush1.msra.mxu0 %v2281
      %2291 = vmatprep.subr.mxu0 0.0
      %2292 = vmatpush1.msra.mxu0 %v2273
      %2293 = vmatprep.subr.mxu0 0.0
      %2294 = vmatpush1.msra.mxu0 %v2272
      %2295 = vmatprep.subr.mxu0 0.0
      %2296 = vmatpush1.msra.mxu0 %v2271
      %2297 = vmatprep.subr.mxu0 0.0
      %2298 = vmatpush1.msra.mxu0 %v2270
      %2299 = vmatprep.subr.mxu0 0.0
      %2300 = vmatpush1.msra.mxu0 %v2269
      %2301 = vmatprep.subr.mxu0 0.0
      %2302 = vmatpush1.msra.mxu0 %v2268
      %2303 = vmatprep.subr.mxu0 0.0
      %2304 = vmatpush1.msra.mxu0 %v2267
      %2305 = vmatprep.subr.mxu0 0.0
      %2306 = vmatpush1.msra.mxu0 %v2266
      %2307 = vmatprep.subr.mxu0 0.0
      %2308 = vmatpush1.msra.mxu0 %v2265
      %2309 = vmatprep.subr.mxu0 0.0
      %2310 = vmatpush1.msra.mxu0 %v2264
      %2311 = vmatprep.subr.mxu0 0.0
      %2312 = vmatpush1.msra.mxu0 %v2263
      %2313 = vmatprep.subr.mxu0 0.0
      %2314 = vmatpush1.msra.mxu0 %v2262
      %2315 = vmatprep.subr.mxu0 0.0
      %2316 = vmatpush2.msra.mxu0 0.0
      %2317 = vmatprep.subr.mxu0 0.0
      %2318 = vmatpush2.msra.mxu0 0.0
      %2319 = vmatprep.subr.mxu0 0.0
      %2320 = vmatpush2.msra.mxu0 0.0
      %2321 = vmatprep.subr.mxu0 0.0
      %2322 = vmatpush2.msra.mxu0 0.0
      %2323 = vmatprep.subr.mxu0 0.0
      %2324 = vmatpush2.msra.mxu0 0.0
      %2325 = vmatprep.subr.mxu0 0.0
      %2326 = vmatpush2.msra.mxu0 0.0
      %2327 = vmatprep.subr.mxu0 0.0
      %2328 = vmatpush2.msra.mxu0 0.0
      %2329 = vmatprep.subr.mxu0 0.0
      %2330 = vmatpush2.msra.mxu0 0.0
      %2331 = vmatprep.subr.mxu0 0.0
      %2332 = vmatpush2.msra.mxu0 0.0
      %2333 = vmatprep.subr.mxu0 0.0
      %2334 = vmatpush2.msra.mxu0 0.0
      %2335 = vmatprep.subr.mxu0 0.0
      %2336 = vmatpush2.msra.mxu0 0.0
      %2337 = vmatprep.subr.mxu0 0.0
      %2338 = vmatpush2.msra.mxu0 0.0
      %2339 = vmatprep.subr.mxu0 0.0
      %2340 = vmatpush2.msra.mxu0 0.0
      %2341 = vmatprep.subr.mxu0 0.0
      %2342 = vmatpush2.msra.mxu0 0.0
      %2343 = vmatprep.subr.mxu0 0.0
      %2344 = vmatpush2.msra.mxu0 0.0
      %2345 = vmatprep.subr.mxu0 0.0
      %2346 = vmatpush2.msra.mxu0 0.0
      %2347 = vmatprep.mubr.f32.mxu0 0.0
      %2348 = vmatmul.mubr.f32.gmra.mxu0 %v2278
      %v2349 = vpop.f32.mrf.mxu0
      %v2350 = vadd.f32 %v2275, %v2349
      %v2351 = vpop.f32.mrf.mxu0
      %2352 = vdwg.mxu0
      %vm2353 = vcmask 0
      %2354 = vst.msk [vmem:[%s438] sm:$0x1] %vm2353, %v2350
      %p2355 = scmp.lt.s32.totalorder %s26, 1
      %s2356 = scalar_select %p2355, %s26, 1
      %s2357 = scalar_lea.vmem %s13, %s2356
      // Predicated region
      $region73: #{eeg_age_net.1} parent=71 // pred_check
        %p2358 = pneg %p322
      $region74: #{eeg_age_net.1} parent=71 // pred_check_branch
        %2360 = sbr.rel (%p2358) target = $region76
      $region75: #{eeg_age_net.1} parent=71 // pred_region
        _
      $region76: #{eeg_age_net.1} parent=71 // pred_fallthru
        _
    $region72: #{eeg_age_net.1} parent=5 // pred_fallthru
      _
    %p2361 = scmp.le.s32.totalorder 2, %s21
    // Predicated region
    $region77: #{eeg_age_net.1} parent=5 // pred_check
      %p2362 = pneg %p2361
    $region78: #{eeg_age_net.1} parent=5 // pred_check_branch
      %2364 = sbr.rel (%p2362) target = $region80
    $region79: #{eeg_age_net.1} parent=5 // pred_region
      %s2365 = ssub.s32 %s21, 2
      // Predicated region
      $region81: #{eeg_age_net.1} parent=79 // pred_check
        %p2366 = pneg %p328
      $region82: #{eeg_age_net.1} parent=79 // pred_check_branch
        %2368 = sbr.rel (%p2366) target = $region84
      $region83: #{eeg_age_net.1} parent=79 // pred_region
        %p2369 = scmp.lt.s32.totalorder %s27, 1
        %s2370 = scalar_select %p2369, %s27, 1
        %s2371 = scalar_lea.vmem %s13, %s2370
      $region84: #{eeg_age_net.1} parent=79 // pred_fallthru
        _
    $region80: #{eeg_age_net.1} parent=5 // pred_fallthru
      _
  $region6: #{eeg_age_net.1} parent=0 // loop_footer
    %s25 = sadd.s32 1, %s21
  $region7: #{eeg_age_net.1} parent=0 // loop_footer_branch
    %20 = sbr.rel target = $region3
  $region8: #{eeg_age_net.1} parent=0 // loop_exit
    _

</llo_original>
